<compile_context>
chip_gen: v7x
topology: tpu7x:2x2x1
jax: 0.10.0
libtpu: 0.0.40
codegen_flags: <defaults>
</compile_context>

<pallas_src>
import functools
import math

import jax
import jax.numpy as jnp
from jax.experimental import pallas as pl
from jax.experimental.pallas import tpu as pltpu

N_NODES = 90          # real node count
N_PAD = 128           # node axis padded to a sublane/lane friendly size
IN_DIM = 136          # real input feature dim
D_PAD = 256           # input feature axis padded to a multiple of 128
HIDDEN = 128
CLS_HIDDEN = 512
OUT_PAD = 128         # classifier output padded to a lane-dense width
BN_EPS = 1e-5


# ----------------------------------------------------------------------------
# Fused forward kernel: everything resident in VMEM (< 1.5 MiB total).
# ----------------------------------------------------------------------------
def _fused_forward_kernel(x_ref, dinv_ref, gw_ref, wc1_ref, wc2_ref, cls_ref,
                          o_ref, *, batch):
    nrows = batch * N_PAD
    dinv = dinv_ref[...]                       # (B*N_PAD, 1) f32, 0 on padded rows

    def aggregate(h):
        # A_hat @ h for the tridiagonal A_hat, batch-folded, MXU-free.
        # z is zero on padded rows (dinv == 0 there), so the circular wrap of
        # both rolls (incl. across batch boundaries) contributes nothing.
        z = dinv * h
        nbr = pltpu.roll(z, 1, axis=0) + pltpu.roll(z, nrows - 1, axis=0)
        return dinv * (z + nbr)

    def gcn(h, w1, w2):
        # MLP = Linear1 -> ReLU -> Linear2, with both eval-mode BatchNorms
        # folded into the (bf16) weights host-side; biases are exactly zero.
        agg = aggregate(h)
        t = jnp.dot(agg.astype(jnp.bfloat16), w1,
                    preferred_element_type=jnp.float32)
        t = jnp.maximum(t, 0.0)
        return jnp.dot(t.astype(jnp.bfloat16), w2,
                       preferred_element_type=jnp.float32)

    # ---- GCN_1 + outer ReLU --------------------------------------------------
    h1 = gcn(x_ref[...],
             gw_ref[0:D_PAD, :],
             gw_ref[D_PAD:D_PAD + HIDDEN, :])
    h1 = jnp.maximum(h1, 0.0)                  # F.relu(GCN_1(...))

    # ---- GCN_2 ----------------------------------------------------------------
    h2 = gcn(h1,
             gw_ref[D_PAD + HIDDEN:D_PAD + 2 * HIDDEN, :],
             gw_ref[D_PAD + 2 * HIDDEN:D_PAD + 3 * HIDDEN, :])

    # ---- softmax over the batch axis (PyTorch F.softmax implicit dim=0) -------
    # Per-batch slices are tile-aligned (multiples of 128 rows) value views.
    parts = [h2[b * N_PAD:(b + 1) * N_PAD, :] for b in range(batch)]
    m = parts[0]
    for p in parts[1:]:
        m = jnp.maximum(m, p)
    exps = [jnp.exp(p - m) for p in parts]
    denom = exps[0]
    for e in exps[1:]:
        denom = denom + e

    # ---- pooling: Pool = ones over the 90 real nodes --------------------------
    # Masked node-axis sum (padded rows would otherwise contribute 1/B each).
    node_mask = (jax.lax.broadcasted_iota(jnp.int32, (N_PAD, HIDDEN), 0)
                 < N_NODES).astype(jnp.float32)
    scale = pl.reciprocal(denom, approx=True) * node_mask       # EUP slot
    pooled = jnp.concatenate(
        [jnp.sum(e * scale, axis=0, keepdims=True) for e in exps], axis=0)  # (B, H)

    # ---- classifier: Linear(128,512) -> Dropout -> PReLU(512) -> Linear(512, out)
    bc1 = cls_ref[0:1, :]
    alpha = cls_ref[1:2, :]
    bc2 = cls_ref[2:3, 0:OUT_PAD]
    z = jnp.dot(pooled.astype(jnp.bfloat16), wc1_ref[...],
                preferred_element_type=jnp.float32) + bc1
    # TODO(synk): nn.Dropout(p=final_dropout) is identity in eval mode; not applied.
    z = jnp.maximum(z, 0.0) + alpha * jnp.minimum(z, 0.0)       # PReLU(512)
    o_ref[...] = jnp.dot(z.astype(jnp.bfloat16), wc2_ref[...],
                         preferred_element_type=jnp.float32) + bc2


@functools.partial(jax.jit, static_argnames=("out_dim",))
def graph_cnn_kipf_forward(x_concat, params, out_dim):
    """x_concat: (B, 90, 136) float32 node features -> (B, out_dim) scores."""
    B = x_concat.shape[0]
    # Zero-pad nodes 90 -> 128 and features 136 -> 256 (inert: dinv / W1 rows zero),
    # fold batch into the row axis.  All under jit, so this fuses with the call.
    x_pad = jnp.pad(x_concat.astype(jnp.float32),
                    ((0, 0), (0, N_PAD - N_NODES), (0, D_PAD - IN_DIM)))
    x_flat = x_pad.reshape(B * N_PAD, D_PAD)
    dinv = jnp.tile(params["dinv"], (B, 1))                     # (B*N_PAD, 1)

    kernel = functools.partial(_fused_forward_kernel, batch=B)
    out_padded = pl.pallas_call(
        kernel,
        out_shape=jax.ShapeDtypeStruct((B, OUT_PAD), jnp.float32),
    )(x_flat, dinv, params["gcn_w"], params["wc1"], params["wc2"], params["cls"])
    return out_padded[:, :out_dim]


# ----------------------------------------------------------------------------
# Host-side parameter prep (built once in init, not per forward call).
# ----------------------------------------------------------------------------
def xavier_uniform(key, fan_in, fan_out):
    bound = math.sqrt(6.0 / (fan_in + fan_out))
    return jax.random.uniform(key, (fan_in, fan_out), jnp.float32, -bound, bound)


def default_linear(key, fan_in, fan_out):
    kw, kb = jax.random.split(key)
    bound = 1.0 / math.sqrt(fan_in)
    w = jax.random.uniform(kw, (fan_in, fan_out), jnp.float32, -bound, bound)
    b = jax.random.uniform(kb, (1, fan_out), jnp.float32, -bound, bound)
    return w, b


def _build_dinv():
    # deg from Comp_degree(A + I) of the |i-j| == 1 band graph:
    # deg = in_deg + out_deg - diag  (3 at chain ends, 5 interior).
    idx = jnp.arange(N_NODES)
    band = (jnp.abs(idx[:, None] - idx[None, :]) == 1).astype(jnp.float32)
    a_norm = band + jnp.eye(N_NODES, dtype=jnp.float32)
    deg = jnp.sum(a_norm, axis=1) + jnp.sum(a_norm, axis=0) - jnp.diagonal(a_norm)
    dinv = deg ** -0.5            # fractional_matrix_power(D, -0.5); D diagonal > 0
    return jnp.pad(dinv, (0, N_PAD - N_NODES)).reshape(N_PAD, 1)


def init_params(key, output_dim):
    assert output_dim <= OUT_PAD
    ks = jax.random.split(key, 6)
    p = {}
    p["dinv"] = _build_dinv()

    # BatchNorm1d in eval mode with default running stats: y = x / sqrt(1 + eps).
    # Folded into the Linear weights (per-output-channel scale).
    # TODO(synk): with trained checkpoints the running-mean term becomes an
    # additive bias; extend the folding before loading real weights.
    bn_scale = 1.0 / math.sqrt(1.0 + BN_EPS)

    # GCN MLP weights (xavier, biases exactly zero per GraphConv_kipf.__init__),
    # BN folded in, packed into one bf16 slab (row blocks: g1_w1|g1_w2|g2_w1|g2_w2).
    g1_w1 = jnp.pad(xavier_uniform(ks[0], IN_DIM, HIDDEN) * bn_scale,
                    ((0, D_PAD - IN_DIM), (0, 0)))     # zero rows match padded features
    g1_w2 = xavier_uniform(ks[1], HIDDEN, HIDDEN) * bn_scale
    g2_w1 = xavier_uniform(ks[2], HIDDEN, HIDDEN) * bn_scale
    g2_w2 = xavier_uniform(ks[3], HIDDEN, HIDDEN) * bn_scale
    p["gcn_w"] = jnp.concatenate([g1_w1, g1_w2, g2_w1, g2_w2],
                                 axis=0).astype(jnp.bfloat16)   # (640, 128)

    # Classifier: Linear(128,512) -> Dropout (eval: identity) -> PReLU(512) -> Linear(512, out)
    wc1, bc1 = default_linear(ks[4], HIDDEN, CLS_HIDDEN)
    wc2, bc2 = default_linear(ks[5], CLS_HIDDEN, output_dim)
    alpha = jnp.full((1, CLS_HIDDEN), 0.25, jnp.float32)        # PReLU default init
    p["wc1"] = wc1.astype(jnp.bfloat16)                          # (128, 512)
    p["wc2"] = jnp.pad(wc2, ((0, 0), (0, OUT_PAD - output_dim))).astype(jnp.bfloat16)
    bc2_pad = jnp.pad(bc2, ((0, 0), (0, CLS_HIDDEN - output_dim)))
    p["cls"] = jnp.concatenate([bc1, alpha, bc2_pad], axis=0)    # (3, 512) f32
    return p


if __name__ == "__main__":
    key = jax.random.PRNGKey(0)
    k_x, k_p = jax.random.split(key)
    B = 2
    OUTPUT_DIM = 8
    # Each graph's node_features.view(1, -1, 136) -> X_concat is (B, 90, 136)
    x_concat = jax.random.normal(k_x, (B, N_NODES, IN_DIM), jnp.float32)
    params = init_params(k_p, OUTPUT_DIM)
    score = graph_cnn_kipf_forward(x_concat, params, OUTPUT_DIM)
    score = jax.block_until_ready(score)
    assert score.shape == (B, OUTPUT_DIM)
    assert bool(jnp.all(jnp.isfinite(score)))
    print("KERNEL_OK")
</pallas_src>

<mosaic_0001>
module attributes {stable_mosaic.version = 11 : i64} {
  func.func @_fused_forward_kernel(%arg0: memref<256x256xf32, #tpu.memory_space<vmem>>, %arg1: memref<256x1xf32, #tpu.memory_space<vmem>>, %arg2: memref<640x128xbf16, #tpu.memory_space<vmem>>, %arg3: memref<128x512xbf16, #tpu.memory_space<vmem>>, %arg4: memref<512x128xbf16, #tpu.memory_space<vmem>>, %arg5: memref<3x512xf32, #tpu.memory_space<vmem>>, %arg6: memref<2x128xf32, #tpu.memory_space<vmem>>) attributes {dimension_semantics = [], scalar_prefetch = 0 : i64, scratch_operands = 0 : i64, tpu.core_type = #tpu.core_type<tc>} {
    %c0 = arith.constant 0 : index
    %c0_0 = arith.constant 0 : index
    %0 = vector.load %arg1[%c0, %c0_0] : memref<256x1xf32, #tpu.memory_space<vmem>>, vector<256x1xf32>
    %c0_1 = arith.constant 0 : index
    %c0_2 = arith.constant 0 : index
    %1 = vector.load %arg0[%c0_1, %c0_2] : memref<256x256xf32, #tpu.memory_space<vmem>>, vector<256x256xf32>
    %c0_3 = arith.constant 0 : index
    %c0_4 = arith.constant 0 : index
    %2 = vector.load %arg2[%c0_3, %c0_4] : memref<640x128xbf16, #tpu.memory_space<vmem>>, vector<256x128xbf16>
    %c256 = arith.constant 256 : index
    %c0_5 = arith.constant 0 : index
    %3 = vector.load %arg2[%c256, %c0_5] : memref<640x128xbf16, #tpu.memory_space<vmem>>, vector<128x128xbf16>
    %4 = vector.broadcast %0 : vector<256x1xf32> to vector<256x256xf32>
    %5 = arith.mulf %4, %1 : vector<256x256xf32>
    %c1_i32 = arith.constant 1 : i32
    %6 = tpu.dynamic_rotate %5 by %c1_i32 dim 0 : vector<256x256xf32>, i32 -> vector<256x256xf32>
    %c255_i32 = arith.constant 255 : i32
    %7 = tpu.dynamic_rotate %5 by %c255_i32 dim 0 : vector<256x256xf32>, i32 -> vector<256x256xf32>
    %8 = arith.addf %6, %7 : vector<256x256xf32>
    %9 = arith.addf %5, %8 : vector<256x256xf32>
    %10 = vector.broadcast %0 : vector<256x1xf32> to vector<256x256xf32>
    %11 = arith.mulf %10, %9 : vector<256x256xf32>
    %12 = arith.truncf %11 : vector<256x256xf32> to vector<256x256xbf16>
    %cst = arith.constant dense<0.000000e+00> : vector<256x128xf32>
    %13 = tpu.matmul %12, %2, %cst {dimension_numbers = #tpu.dot_dimension_numbers<[1], [0], [0], [1], [0, 0, 1, 1], [], []>} : vector<256x256xbf16>, vector<256x128xbf16>, vector<256x128xf32> -> vector<256x128xf32>
    %cst_6 = arith.constant 0.000000e+00 : f32
    %14 = vector.broadcast %cst_6 : f32 to vector<256x128xf32>
    %15 = arith.maximumf %13, %14 : vector<256x128xf32>
    %16 = arith.truncf %15 : vector<256x128xf32> to vector<256x128xbf16>
    %cst_7 = arith.constant dense<0.000000e+00> : vector<256x128xf32>
    %17 = tpu.matmul %16, %3, %cst_7 {dimension_numbers = #tpu.dot_dimension_numbers<[1], [0], [0], [1], [0, 0, 1, 1], [], []>} : vector<256x128xbf16>, vector<128x128xbf16>, vector<256x128xf32> -> vector<256x128xf32>
    %cst_8 = arith.constant 0.000000e+00 : f32
    %18 = vector.broadcast %cst_8 : f32 to vector<256x128xf32>
    %19 = arith.maximumf %17, %18 : vector<256x128xf32>
    %c384 = arith.constant 384 : index
    %c0_9 = arith.constant 0 : index
    %20 = vector.load %arg2[%c384, %c0_9] : memref<640x128xbf16, #tpu.memory_space<vmem>>, vector<128x128xbf16>
    %c512 = arith.constant 512 : index
    %c0_10 = arith.constant 0 : index
    %21 = vector.load %arg2[%c512, %c0_10] : memref<640x128xbf16, #tpu.memory_space<vmem>>, vector<128x128xbf16>
    %22 = vector.broadcast %0 : vector<256x1xf32> to vector<256x128xf32>
    %23 = arith.mulf %22, %19 : vector<256x128xf32>
    %c1_i32_11 = arith.constant 1 : i32
    %24 = tpu.dynamic_rotate %23 by %c1_i32_11 dim 0 : vector<256x128xf32>, i32 -> vector<256x128xf32>
    %c255_i32_12 = arith.constant 255 : i32
    %25 = tpu.dynamic_rotate %23 by %c255_i32_12 dim 0 : vector<256x128xf32>, i32 -> vector<256x128xf32>
    %26 = arith.addf %24, %25 : vector<256x128xf32>
    %27 = arith.addf %23, %26 : vector<256x128xf32>
    %28 = vector.broadcast %0 : vector<256x1xf32> to vector<256x128xf32>
    %29 = arith.mulf %28, %27 : vector<256x128xf32>
    %30 = arith.truncf %29 : vector<256x128xf32> to vector<256x128xbf16>
    %cst_13 = arith.constant dense<0.000000e+00> : vector<256x128xf32>
    %31 = tpu.matmul %30, %20, %cst_13 {dimension_numbers = #tpu.dot_dimension_numbers<[1], [0], [0], [1], [0, 0, 1, 1], [], []>} : vector<256x128xbf16>, vector<128x128xbf16>, vector<256x128xf32> -> vector<256x128xf32>
    %cst_14 = arith.constant 0.000000e+00 : f32
    %32 = vector.broadcast %cst_14 : f32 to vector<256x128xf32>
    %33 = arith.maximumf %31, %32 : vector<256x128xf32>
    %34 = arith.truncf %33 : vector<256x128xf32> to vector<256x128xbf16>
    %cst_15 = arith.constant dense<0.000000e+00> : vector<256x128xf32>
    %35 = tpu.matmul %34, %21, %cst_15 {dimension_numbers = #tpu.dot_dimension_numbers<[1], [0], [0], [1], [0, 0, 1, 1], [], []>} : vector<256x128xbf16>, vector<128x128xbf16>, vector<256x128xf32> -> vector<256x128xf32>
    %36 = vector.extract_strided_slice %35 {offsets = [0, 0], sizes = [128, 128], strides = [1, 1]} : vector<256x128xf32> to vector<128x128xf32>
    %37 = vector.extract_strided_slice %35 {offsets = [128, 0], sizes = [128, 128], strides = [1, 1]} : vector<256x128xf32> to vector<128x128xf32>
    %38 = arith.maximumf %36, %37 : vector<128x128xf32>
    %39 = arith.subf %36, %38 : vector<128x128xf32>
    %40 = math.exp %39 : vector<128x128xf32>
    %41 = arith.subf %37, %38 : vector<128x128xf32>
    %42 = math.exp %41 : vector<128x128xf32>
    %43 = arith.addf %40, %42 : vector<128x128xf32>
    %44 = tpu.iota {dimensions = array<i32: 0>} : vector<128x128xi32>
    %c90_i32 = arith.constant 90 : i32
    %45 = vector.broadcast %c90_i32 : i32 to vector<128x128xi32>
    %46 = arith.cmpi slt, %44, %45 : vector<128x128xi32>
    %47 = arith.extui %46 : vector<128x128xi1> to vector<128x128xi32>
    %48 = arith.sitofp %47 : vector<128x128xi32> to vector<128x128xf32>
    %49 = tpu.reciprocal %43 {approx = true} : vector<128x128xf32> -> vector<128x128xf32>
    %50 = arith.mulf %49, %48 : vector<128x128xf32>
    %51 = arith.mulf %40, %50 : vector<128x128xf32>
    %cst_16 = arith.constant dense<0.000000e+00> : vector<128xf32>
    %52 = vector.multi_reduction <add>, %51, %cst_16 [0] : vector<128x128xf32> to vector<128xf32>
    %53 = vector.shape_cast %52 : vector<128xf32> to vector<1x128xf32>
    %54 = arith.mulf %42, %50 : vector<128x128xf32>
    %cst_17 = arith.constant dense<0.000000e+00> : vector<128xf32>
    %55 = vector.multi_reduction <add>, %54, %cst_17 [0] : vector<128x128xf32> to vector<128xf32>
    %56 = vector.shape_cast %55 : vector<128xf32> to vector<1x128xf32>
    %57 = tpu.concatenate %53, %56 in 0 : vector<1x128xf32>, vector<1x128xf32> -> vector<2x128xf32>
    %c0_18 = arith.constant 0 : index
    %c0_19 = arith.constant 0 : index
    %58 = vector.load %arg5[%c0_18, %c0_19] : memref<3x512xf32, #tpu.memory_space<vmem>>, vector<1x512xf32>
    %c1 = arith.constant 1 : index
    %c0_20 = arith.constant 0 : index
    %59 = vector.load %arg5[%c1, %c0_20] : memref<3x512xf32, #tpu.memory_space<vmem>>, vector<1x512xf32>
    %c2 = arith.constant 2 : index
    %c0_21 = arith.constant 0 : index
    %60 = vector.load %arg5[%c2, %c0_21] : memref<3x512xf32, #tpu.memory_space<vmem>>, vector<1x128xf32>
    %61 = arith.truncf %57 : vector<2x128xf32> to vector<2x128xbf16>
    %c0_22 = arith.constant 0 : index
    %c0_23 = arith.constant 0 : index
    %62 = vector.load %arg3[%c0_22, %c0_23] : memref<128x512xbf16, #tpu.memory_space<vmem>>, vector<128x512xbf16>
    %cst_24 = arith.constant dense<0.000000e+00> : vector<2x512xf32>
    %63 = tpu.matmul %61, %62, %cst_24 {dimension_numbers = #tpu.dot_dimension_numbers<[1], [0], [0], [1], [0, 0, 1, 1], [], []>} : vector<2x128xbf16>, vector<128x512xbf16>, vector<2x512xf32> -> vector<2x512xf32>
    %64 = vector.broadcast %58 : vector<1x512xf32> to vector<2x512xf32>
    %65 = arith.addf %63, %64 : vector<2x512xf32>
    %cst_25 = arith.constant 0.000000e+00 : f32
    %66 = vector.broadcast %cst_25 : f32 to vector<2x512xf32>
    %67 = arith.maximumf %65, %66 : vector<2x512xf32>
    %cst_26 = arith.constant 0.000000e+00 : f32
    %68 = vector.broadcast %cst_26 : f32 to vector<2x512xf32>
    %69 = arith.minimumf %65, %68 : vector<2x512xf32>
    %70 = vector.broadcast %59 : vector<1x512xf32> to vector<2x512xf32>
    %71 = arith.mulf %70, %69 : vector<2x512xf32>
    %72 = arith.addf %67, %71 : vector<2x512xf32>
    %73 = arith.truncf %72 : vector<2x512xf32> to vector<2x512xbf16>
    %c0_27 = arith.constant 0 : index
    %c0_28 = arith.constant 0 : index
    %74 = vector.load %arg4[%c0_27, %c0_28] : memref<512x128xbf16, #tpu.memory_space<vmem>>, vector<512x128xbf16>
    %cst_29 = arith.constant dense<0.000000e+00> : vector<2x128xf32>
    %75 = tpu.matmul %73, %74, %cst_29 {dimension_numbers = #tpu.dot_dimension_numbers<[1], [0], [0], [1], [0, 0, 1, 1], [], []>} : vector<2x512xbf16>, vector<512x128xbf16>, vector<2x128xf32> -> vector<2x128xf32>
    %76 = vector.broadcast %60 : vector<1x128xf32> to vector<2x128xf32>
    %77 = arith.addf %75, %76 : vector<2x128xf32>
    %c0_30 = arith.constant 0 : index
    %c0_31 = arith.constant 0 : index
    %78 = vector.load %arg6[%c0_30, %c0_31] : memref<2x128xf32, #tpu.memory_space<vmem>>, vector<2x128xf32>
    tpu.vector_store %arg6[%c0_30, %c0_31], %77 {strides = array<i32>} : memref<2x128xf32, #tpu.memory_space<vmem>>, vector<2x128xf32>,
    return
  }
}

</mosaic_0001>

<llo_original>
// kernel: graph_cnn_kipf_forward.1
$region0: #{graph_cnn_kipf_forward.1}
  #allocation0 [shape = 'u32[]', space=smem, size = 0x4, offset = 0x4, fixed_abs, tag = 'smem constant byte address 0x4 - core index']
  #allocation1 [shape = 'u32[144,128]{1,0:T(1,128)}', space=vmem, size = 0x12000, scoped, tag = 'internal scratch']
  %s0 = inlined_call_operand.vmem [shape: f32[256,256], index: 0, kind: input, shape index: {}]
  %s1 = inlined_call_operand.vmem [shape: f32[256,1], index: 1, kind: input, shape index: {}]
  %s2 = inlined_call_operand.vmem [shape: bf16[640,128], index: 2, kind: input, shape index: {}]
  %s3 = inlined_call_operand.vmem [shape: bf16[128,512], index: 3, kind: input, shape index: {}]
  %s4 = inlined_call_operand.vmem [shape: bf16[512,128], index: 4, kind: input, shape index: {}]
  %s5 = inlined_call_operand.vmem [shape: f32[3,512], index: 5, kind: input, shape index: {}]
  %s6 = inlined_call_operand.hbm [shape: f32[2,128], index: 6, kind: output, shape index: {}]
  %s7 = sld [smem:[#allocation0]]
  $region34: #{graph_cnn_kipf_forward.1} parent=0
    _
  %s9 = ssub.s32 1, %s7
  %s10 = scalar_select 0, %s9, %s7
  $region1: #{graph_cnn_kipf_forward.1} parent=0
    #allocation2 [shape = 'u8[1024]{0}', space=vmem, size = 0x400, scoped, tag = 'output window, operand 0, single buffered']
    #allocation3 [shape = 's32[1]{0}', space=sflag, size = 0x4, scoped, tag = 'scoped memory for graph_cnn_kipf_forward.1']
    %11 = vsyncpa [#allocation3], 0
    // Predicated region
    $region2: #{graph_cnn_kipf_forward.1} parent=1 // pred_check
      _
    $region3: #{graph_cnn_kipf_forward.1} parent=1 // pred_check_branch
      %13 = sbr.rel (0) target = $region5
    $region4: #{graph_cnn_kipf_forward.1} parent=1 // pred_region
      _
    $region5: #{graph_cnn_kipf_forward.1} parent=1 // pred_fallthru
      _
    // Predicated region
    $region6: #{graph_cnn_kipf_forward.1} parent=1 // pred_check
      _
    $region7: #{graph_cnn_kipf_forward.1} parent=1 // pred_check_branch
      %15 = sbr.rel (0) target = $region9
    $region8: #{graph_cnn_kipf_forward.1} parent=1 // pred_region
      _
    $region9: #{graph_cnn_kipf_forward.1} parent=1 // pred_fallthru
      _
    // Predicated region
    $region10: #{graph_cnn_kipf_forward.1} parent=1 // pred_check
      _
    $region11: #{graph_cnn_kipf_forward.1} parent=1 // pred_check_branch
      %17 = sbr.rel (0) target = $region13
    $region12: #{graph_cnn_kipf_forward.1} parent=1 // pred_region
      _
    $region13: #{graph_cnn_kipf_forward.1} parent=1 // pred_fallthru
      _
    // Predicated region
    $region14: #{graph_cnn_kipf_forward.1} parent=1 // pred_check
      _
    $region15: #{graph_cnn_kipf_forward.1} parent=1 // pred_check_branch
      %19 = sbr.rel (0) target = $region17
    $region16: #{graph_cnn_kipf_forward.1} parent=1 // pred_region
      _
    $region17: #{graph_cnn_kipf_forward.1} parent=1 // pred_fallthru
      _
    // Predicated region
    $region18: #{graph_cnn_kipf_forward.1} parent=1 // pred_check
      _
    $region19: #{graph_cnn_kipf_forward.1} parent=1 // pred_check_branch
      %21 = sbr.rel (0) target = $region21
    $region20: #{graph_cnn_kipf_forward.1} parent=1 // pred_region
      _
    $region21: #{graph_cnn_kipf_forward.1} parent=1 // pred_fallthru
      _
    // Predicated region
    $region22: #{graph_cnn_kipf_forward.1} parent=1 // pred_check
      _
    $region23: #{graph_cnn_kipf_forward.1} parent=1 // pred_check_branch
      %23 = sbr.rel (0) target = $region25
    $region24: #{graph_cnn_kipf_forward.1} parent=1 // pred_region
      _
    $region25: #{graph_cnn_kipf_forward.1} parent=1 // pred_fallthru
      _
    %v25 = vld [vmem:[%s1] sm:$0xff]
    %v26 = vld [vmem:[%s1 + $0x8] sm:$0xff]
    %v27 = vld [vmem:[%s1 + $0x10] sm:$0xff]
    %v28 = vld [vmem:[%s1 + $0x18] sm:$0xff]
    %v29 = vld [vmem:[%s1 + $0x20] sm:$0xff]
    %v30 = vld [vmem:[%s1 + $0x28] sm:$0xff]
    %v31 = vld [vmem:[%s1 + $0x30] sm:$0xff]
    %v32 = vld [vmem:[%s1 + $0x38] sm:$0xff]
    %v33 = vld [vmem:[%s1 + $0x40] sm:$0xff]
    %v34 = vld [vmem:[%s1 + $0x48] sm:$0xff]
    %v35 = vld [vmem:[%s1 + $0x50] sm:$0xff]
    %v36 = vld [vmem:[%s1 + $0x58] sm:$0xff]
    %v37 = vld [vmem:[%s1 + $0x60] sm:$0xff]
    %v38 = vld [vmem:[%s1 + $0x68] sm:$0xff]
    %v39 = vld [vmem:[%s1 + $0x70] sm:$0xff]
    %v40 = vld [vmem:[%s1 + $0x78] sm:$0xff]
    %v41 = vld [vmem:[%s1 + $0x80] sm:$0xff]
    %v42 = vld [vmem:[%s1 + $0x88] sm:$0xff]
    %v43 = vld [vmem:[%s1 + $0x90] sm:$0xff]
    %v44 = vld [vmem:[%s1 + $0x98] sm:$0xff]
    %v45 = vld [vmem:[%s1 + $0xa0] sm:$0xff]
    %v46 = vld [vmem:[%s1 + $0xa8] sm:$0xff]
    %v47 = vld [vmem:[%s1 + $0xb0] sm:$0xff]
    %v48 = vld [vmem:[%s1 + $0xb8] sm:$0xff]
    %v49 = vld [vmem:[%s1 + $0xc0] sm:$0xff]
    %v50 = vld [vmem:[%s1 + $0xc8] sm:$0xff]
    %v51 = vld [vmem:[%s1 + $0xd0] sm:$0xff]
    %v52 = vld [vmem:[%s1 + $0xd8] sm:$0xff]
    %v53 = vld [vmem:[%s1 + $0xe0] sm:$0xff]
    %v54 = vld [vmem:[%s1 + $0xe8] sm:$0xff]
    %v55 = vld [vmem:[%s1 + $0xf0] sm:$0xff]
    %v56 = vld [vmem:[%s1 + $0xf8] sm:$0xff]
    %v57 = vld [vmem:[%s0] sm:$0xff]
    %v58 = vld [vmem:[%s0 + $0x8] sm:$0xff]
    %v59 = vld [vmem:[%s0 + $0x10] sm:$0xff]
    %v60 = vld [vmem:[%s0 + $0x18] sm:$0xff]
    %v61 = vld [vmem:[%s0 + $0x20] sm:$0xff]
    %v62 = vld [vmem:[%s0 + $0x28] sm:$0xff]
    %v63 = vld [vmem:[%s0 + $0x30] sm:$0xff]
    %v64 = vld [vmem:[%s0 + $0x38] sm:$0xff]
    %v65 = vld [vmem:[%s0 + $0x40] sm:$0xff]
    %v66 = vld [vmem:[%s0 + $0x48] sm:$0xff]
    %v67 = vld [vmem:[%s0 + $0x50] sm:$0xff]
    %v68 = vld [vmem:[%s0 + $0x58] sm:$0xff]
    %v69 = vld [vmem:[%s0 + $0x60] sm:$0xff]
    %v70 = vld [vmem:[%s0 + $0x68] sm:$0xff]
    %v71 = vld [vmem:[%s0 + $0x70] sm:$0xff]
    %v72 = vld [vmem:[%s0 + $0x78] sm:$0xff]
    %v73 = vld [vmem:[%s0 + $0x80] sm:$0xff]
    %v74 = vld [vmem:[%s0 + $0x88] sm:$0xff]
    %v75 = vld [vmem:[%s0 + $0x90] sm:$0xff]
    %v76 = vld [vmem:[%s0 + $0x98] sm:$0xff]
    %v77 = vld [vmem:[%s0 + $0xa0] sm:$0xff]
    %v78 = vld [vmem:[%s0 + $0xa8] sm:$0xff]
    %v79 = vld [vmem:[%s0 + $0xb0] sm:$0xff]
    %v80 = vld [vmem:[%s0 + $0xb8] sm:$0xff]
    %v81 = vld [vmem:[%s0 + $0xc0] sm:$0xff]
    %v82 = vld [vmem:[%s0 + $0xc8] sm:$0xff]
    %v83 = vld [vmem:[%s0 + $0xd0] sm:$0xff]
    %v84 = vld [vmem:[%s0 + $0xd8] sm:$0xff]
    %v85 = vld [vmem:[%s0 + $0xe0] sm:$0xff]
    %v86 = vld [vmem:[%s0 + $0xe8] sm:$0xff]
    %v87 = vld [vmem:[%s0 + $0xf0] sm:$0xff]
    %v88 = vld [vmem:[%s0 + $0xf8] sm:$0xff]
    %v89 = vld [vmem:[%s0 + $0x100] sm:$0xff]
    %v90 = vld [vmem:[%s0 + $0x108] sm:$0xff]
    %v91 = vld [vmem:[%s0 + $0x110] sm:$0xff]
    %v92 = vld [vmem:[%s0 + $0x118] sm:$0xff]
    %v93 = vld [vmem:[%s0 + $0x120] sm:$0xff]
    %v94 = vld [vmem:[%s0 + $0x128] sm:$0xff]
    %v95 = vld [vmem:[%s0 + $0x130] sm:$0xff]
    %v96 = vld [vmem:[%s0 + $0x138] sm:$0xff]
    %v97 = vld [vmem:[%s0 + $0x140] sm:$0xff]
    %v98 = vld [vmem:[%s0 + $0x148] sm:$0xff]
    %v99 = vld [vmem:[%s0 + $0x150] sm:$0xff]
    %v100 = vld [vmem:[%s0 + $0x158] sm:$0xff]
    %v101 = vld [vmem:[%s0 + $0x160] sm:$0xff]
    %v102 = vld [vmem:[%s0 + $0x168] sm:$0xff]
    %v103 = vld [vmem:[%s0 + $0x170] sm:$0xff]
    %v104 = vld [vmem:[%s0 + $0x178] sm:$0xff]
    %v105 = vld [vmem:[%s0 + $0x180] sm:$0xff]
    %v106 = vld [vmem:[%s0 + $0x188] sm:$0xff]
    %v107 = vld [vmem:[%s0 + $0x190] sm:$0xff]
    %v108 = vld [vmem:[%s0 + $0x198] sm:$0xff]
    %v109 = vld [vmem:[%s0 + $0x1a0] sm:$0xff]
    %v110 = vld [vmem:[%s0 + $0x1a8] sm:$0xff]
    %v111 = vld [vmem:[%s0 + $0x1b0] sm:$0xff]
    %v112 = vld [vmem:[%s0 + $0x1b8] sm:$0xff]
    %v113 = vld [vmem:[%s0 + $0x1c0] sm:$0xff]
    %v114 = vld [vmem:[%s0 + $0x1c8] sm:$0xff]
    %v115 = vld [vmem:[%s0 + $0x1d0] sm:$0xff]
    %v116 = vld [vmem:[%s0 + $0x1d8] sm:$0xff]
    %v117 = vld [vmem:[%s0 + $0x1e0] sm:$0xff]
    %v118 = vld [vmem:[%s0 + $0x1e8] sm:$0xff]
    %v119 = vld [vmem:[%s0 + $0x1f0] sm:$0xff]
    %v120 = vld [vmem:[%s0 + $0x1f8] sm:$0xff]
    %v121 = vld [vmem:[%s2] sm:$0xf]
    %v122 = vld [vmem:[%s2 + $0x4] sm:$0xf]
    %v123 = vld [vmem:[%s2 + $0x8] sm:$0xf]
    %v124 = vld [vmem:[%s2 + $0xc] sm:$0xf]
    %v125 = vld [vmem:[%s2 + $0x10] sm:$0xf]
    %v126 = vld [vmem:[%s2 + $0x14] sm:$0xf]
    %v127 = vld [vmem:[%s2 + $0x18] sm:$0xf]
    %v128 = vld [vmem:[%s2 + $0x1c] sm:$0xf]
    %v129 = vld [vmem:[%s2 + $0x20] sm:$0xf]
    %v130 = vld [vmem:[%s2 + $0x24] sm:$0xf]
    %v131 = vld [vmem:[%s2 + $0x28] sm:$0xf]
    %v132 = vld [vmem:[%s2 + $0x2c] sm:$0xf]
    %v133 = vld [vmem:[%s2 + $0x30] sm:$0xf]
    %v134 = vld [vmem:[%s2 + $0x34] sm:$0xf]
    %v135 = vld [vmem:[%s2 + $0x38] sm:$0xf]
    %v136 = vld [vmem:[%s2 + $0x3c] sm:$0xf]
    %v137 = vld [vmem:[%s2 + $0x40] sm:$0xf]
    %v138 = vld [vmem:[%s2 + $0x44] sm:$0xf]
    %v139 = vld [vmem:[%s2 + $0x48] sm:$0xf]
    %v140 = vld [vmem:[%s2 + $0x4c] sm:$0xf]
    %v141 = vld [vmem:[%s2 + $0x50] sm:$0xf]
    %v142 = vld [vmem:[%s2 + $0x54] sm:$0xf]
    %v143 = vld [vmem:[%s2 + $0x58] sm:$0xf]
    %v144 = vld [vmem:[%s2 + $0x5c] sm:$0xf]
    %v145 = vld [vmem:[%s2 + $0x60] sm:$0xf]
    %v146 = vld [vmem:[%s2 + $0x64] sm:$0xf]
    %v147 = vld [vmem:[%s2 + $0x68] sm:$0xf]
    %v148 = vld [vmem:[%s2 + $0x6c] sm:$0xf]
    %v149 = vld [vmem:[%s2 + $0x70] sm:$0xf]
    %v150 = vld [vmem:[%s2 + $0x74] sm:$0xf]
    %v151 = vld [vmem:[%s2 + $0x78] sm:$0xf]
    %v152 = vld [vmem:[%s2 + $0x7c] sm:$0xf]
    %v153 = vld [vmem:[%s2 + $0x80] sm:$0xf]
    %v154 = vld [vmem:[%s2 + $0x84] sm:$0xf]
    %v155 = vld [vmem:[%s2 + $0x88] sm:$0xf]
    %v156 = vld [vmem:[%s2 + $0x8c] sm:$0xf]
    %v157 = vld [vmem:[%s2 + $0x90] sm:$0xf]
    %v158 = vld [vmem:[%s2 + $0x94] sm:$0xf]
    %v159 = vld [vmem:[%s2 + $0x98] sm:$0xf]
    %v160 = vld [vmem:[%s2 + $0x9c] sm:$0xf]
    %v161 = vld [vmem:[%s2 + $0xa0] sm:$0xf]
    %v162 = vld [vmem:[%s2 + $0xa4] sm:$0xf]
    %v163 = vld [vmem:[%s2 + $0xa8] sm:$0xf]
    %v164 = vld [vmem:[%s2 + $0xac] sm:$0xf]
    %v165 = vld [vmem:[%s2 + $0xb0] sm:$0xf]
    %v166 = vld [vmem:[%s2 + $0xb4] sm:$0xf]
    %v167 = vld [vmem:[%s2 + $0xb8] sm:$0xf]
    %v168 = vld [vmem:[%s2 + $0xbc] sm:$0xf]
    %170 = vset.pattern.permute.xlu0 0
    %171 = vperm.xlu0 %170, %v25
    %v172 = vpop.permute.xlu0 %171
    %175 = vset.pattern.permute.xlu0 0
    %176 = vperm.xlu0 %175, %v26
    %v177 = vpop.permute.xlu0 %176
    %180 = vset.pattern.permute.xlu0 0
    %181 = vperm.xlu0 %180, %v27
    %v182 = vpop.permute.xlu0 %181
    %185 = vset.pattern.permute.xlu0 0
    %186 = vperm.xlu0 %185, %v28
    %v187 = vpop.permute.xlu0 %186
    %190 = vset.pattern.permute.xlu0 0
    %191 = vperm.xlu0 %190, %v29
    %v192 = vpop.permute.xlu0 %191
    %195 = vset.pattern.permute.xlu0 0
    %196 = vperm.xlu0 %195, %v30
    %v197 = vpop.permute.xlu0 %196
    %200 = vset.pattern.permute.xlu0 0
    %201 = vperm.xlu0 %200, %v31
    %v202 = vpop.permute.xlu0 %201
    %205 = vset.pattern.permute.xlu0 0
    %206 = vperm.xlu0 %205, %v32
    %v207 = vpop.permute.xlu0 %206
    %210 = vset.pattern.permute.xlu0 0
    %211 = vperm.xlu0 %210, %v33
    %v212 = vpop.permute.xlu0 %211
    %215 = vset.pattern.permute.xlu0 0
    %216 = vperm.xlu0 %215, %v34
    %v217 = vpop.permute.xlu0 %216
    %220 = vset.pattern.permute.xlu0 0
    %221 = vperm.xlu0 %220, %v35
    %v222 = vpop.permute.xlu0 %221
    %225 = vset.pattern.permute.xlu0 0
    %226 = vperm.xlu0 %225, %v36
    %v227 = vpop.permute.xlu0 %226
    %230 = vset.pattern.permute.xlu0 0
    %231 = vperm.xlu0 %230, %v37
    %v232 = vpop.permute.xlu0 %231
    %235 = vset.pattern.permute.xlu0 0
    %236 = vperm.xlu0 %235, %v38
    %v237 = vpop.permute.xlu0 %236
    %240 = vset.pattern.permute.xlu0 0
    %241 = vperm.xlu0 %240, %v39
    %v242 = vpop.permute.xlu0 %241
    %245 = vset.pattern.permute.xlu0 0
    %246 = vperm.xlu0 %245, %v40
    %v247 = vpop.permute.xlu0 %246
    %250 = vset.pattern.permute.xlu0 0
    %251 = vperm.xlu0 %250, %v41
    %v252 = vpop.permute.xlu0 %251
    %255 = vset.pattern.permute.xlu0 0
    %256 = vperm.xlu0 %255, %v42
    %v257 = vpop.permute.xlu0 %256
    %260 = vset.pattern.permute.xlu0 0
    %261 = vperm.xlu0 %260, %v43
    %v262 = vpop.permute.xlu0 %261
    %265 = vset.pattern.permute.xlu0 0
    %266 = vperm.xlu0 %265, %v44
    %v267 = vpop.permute.xlu0 %266
    %270 = vset.pattern.permute.xlu0 0
    %271 = vperm.xlu0 %270, %v45
    %v272 = vpop.permute.xlu0 %271
    %275 = vset.pattern.permute.xlu0 0
    %276 = vperm.xlu0 %275, %v46
    %v277 = vpop.permute.xlu0 %276
    %280 = vset.pattern.permute.xlu0 0
    %281 = vperm.xlu0 %280, %v47
    %v282 = vpop.permute.xlu0 %281
    %285 = vset.pattern.permute.xlu0 0
    %286 = vperm.xlu0 %285, %v48
    %v287 = vpop.permute.xlu0 %286
    %290 = vset.pattern.permute.xlu0 0
    %291 = vperm.xlu0 %290, %v49
    %v292 = vpop.permute.xlu0 %291
    %295 = vset.pattern.permute.xlu0 0
    %296 = vperm.xlu0 %295, %v50
    %v297 = vpop.permute.xlu0 %296
    %300 = vset.pattern.permute.xlu0 0
    %301 = vperm.xlu0 %300, %v51
    %v302 = vpop.permute.xlu0 %301
    %305 = vset.pattern.permute.xlu0 0
    %306 = vperm.xlu0 %305, %v52
    %v307 = vpop.permute.xlu0 %306
    %310 = vset.pattern.permute.xlu0 0
    %311 = vperm.xlu0 %310, %v53
    %v312 = vpop.permute.xlu0 %311
    %315 = vset.pattern.permute.xlu0 0
    %316 = vperm.xlu0 %315, %v54
    %v317 = vpop.permute.xlu0 %316
    %320 = vset.pattern.permute.xlu0 0
    %321 = vperm.xlu0 %320, %v55
    %v322 = vpop.permute.xlu0 %321
    %325 = vset.pattern.permute.xlu0 0
    %326 = vperm.xlu0 %325, %v56
    %v327 = vpop.permute.xlu0 %326
    %v329 = vmul.f32 %v172, %v57
    %v330 = vmul.f32 %v172, %v58
    %v331 = vmul.f32 %v177, %v59
    %v332 = vmul.f32 %v177, %v60
    %v333 = vmul.f32 %v182, %v61
    %v334 = vmul.f32 %v182, %v62
    %v335 = vmul.f32 %v187, %v63
    %v336 = vmul.f32 %v187, %v64
    %v337 = vmul.f32 %v192, %v65
    %v338 = vmul.f32 %v192, %v66
    %v339 = vmul.f32 %v197, %v67
    %v340 = vmul.f32 %v197, %v68
    %v341 = vmul.f32 %v202, %v69
    %v342 = vmul.f32 %v202, %v70
    %v343 = vmul.f32 %v207, %v71
    %v344 = vmul.f32 %v207, %v72
    %v345 = vmul.f32 %v212, %v73
    %v346 = vmul.f32 %v212, %v74
    %v347 = vmul.f32 %v217, %v75
    %v348 = vmul.f32 %v217, %v76
    %v349 = vmul.f32 %v222, %v77
    %v350 = vmul.f32 %v222, %v78
    %v351 = vmul.f32 %v227, %v79
    %v352 = vmul.f32 %v227, %v80
    %v353 = vmul.f32 %v232, %v81
    %v354 = vmul.f32 %v232, %v82
    %v355 = vmul.f32 %v237, %v83
    %v356 = vmul.f32 %v237, %v84
    %v357 = vmul.f32 %v242, %v85
    %v358 = vmul.f32 %v242, %v86
    %v359 = vmul.f32 %v247, %v87
    %v360 = vmul.f32 %v247, %v88
    %v361 = vmul.f32 %v252, %v89
    %v362 = vmul.f32 %v252, %v90
    %v363 = vmul.f32 %v257, %v91
    %v364 = vmul.f32 %v257, %v92
    %v365 = vmul.f32 %v262, %v93
    %v366 = vmul.f32 %v262, %v94
    %v367 = vmul.f32 %v267, %v95
    %v368 = vmul.f32 %v267, %v96
    %v369 = vmul.f32 %v272, %v97
    %v370 = vmul.f32 %v272, %v98
    %v371 = vmul.f32 %v277, %v99
    %v372 = vmul.f32 %v277, %v100
    %v373 = vmul.f32 %v282, %v101
    %v374 = vmul.f32 %v282, %v102
    %v375 = vmul.f32 %v287, %v103
    %v376 = vmul.f32 %v287, %v104
    %v377 = vmul.f32 %v292, %v105
    %v378 = vmul.f32 %v292, %v106
    %v379 = vmul.f32 %v297, %v107
    %v380 = vmul.f32 %v297, %v108
    %v381 = vmul.f32 %v302, %v109
    %v382 = vmul.f32 %v302, %v110
    %v383 = vmul.f32 %v307, %v111
    %v384 = vmul.f32 %v307, %v112
    %v385 = vmul.f32 %v312, %v113
    %v386 = vmul.f32 %v312, %v114
    %v387 = vmul.f32 %v317, %v115
    %v388 = vmul.f32 %v317, %v116
    %v389 = vmul.f32 %v322, %v117
    %v390 = vmul.f32 %v322, %v118
    %v391 = vmul.f32 %v327, %v119
    %v392 = vmul.f32 %v327, %v120
    %v393 = vrot.slane %v329, 7
    %v394 = vrot.slane %v330, 7
    %v395 = vrot.slane %v331, 7
    %v396 = vrot.slane %v332, 7
    %v397 = vrot.slane %v333, 7
    %v398 = vrot.slane %v334, 7
    %v399 = vrot.slane %v335, 7
    %v400 = vrot.slane %v336, 7
    %v401 = vrot.slane %v337, 7
    %v402 = vrot.slane %v338, 7
    %v403 = vrot.slane %v339, 7
    %v404 = vrot.slane %v340, 7
    %v405 = vrot.slane %v341, 7
    %v406 = vrot.slane %v342, 7
    %v407 = vrot.slane %v343, 7
    %v408 = vrot.slane %v344, 7
    %v409 = vrot.slane %v345, 7
    %v410 = vrot.slane %v346, 7
    %v411 = vrot.slane %v347, 7
    %v412 = vrot.slane %v348, 7
    %v413 = vrot.slane %v349, 7
    %v414 = vrot.slane %v350, 7
    %v415 = vrot.slane %v351, 7
    %v416 = vrot.slane %v352, 7
    %v417 = vrot.slane %v353, 7
    %v418 = vrot.slane %v354, 7
    %v419 = vrot.slane %v355, 7
    %v420 = vrot.slane %v356, 7
    %v421 = vrot.slane %v357, 7
    %v422 = vrot.slane %v358, 7
    %v423 = vrot.slane %v359, 7
    %v424 = vrot.slane %v360, 7
    %v425 = vrot.slane %v361, 7
    %v426 = vrot.slane %v362, 7
    %v427 = vrot.slane %v363, 7
    %v428 = vrot.slane %v364, 7
    %v429 = vrot.slane %v365, 7
    %v430 = vrot.slane %v366, 7
    %v431 = vrot.slane %v367, 7
    %v432 = vrot.slane %v368, 7
    %v433 = vrot.slane %v369, 7
    %v434 = vrot.slane %v370, 7
    %v435 = vrot.slane %v371, 7
    %v436 = vrot.slane %v372, 7
    %v437 = vrot.slane %v373, 7
    %v438 = vrot.slane %v374, 7
    %v439 = vrot.slane %v375, 7
    %v440 = vrot.slane %v376, 7
    %v441 = vrot.slane %v377, 7
    %v442 = vrot.slane %v378, 7
    %v443 = vrot.slane %v379, 7
    %v444 = vrot.slane %v380, 7
    %v445 = vrot.slane %v381, 7
    %v446 = vrot.slane %v382, 7
    %v447 = vrot.slane %v383, 7
    %v448 = vrot.slane %v384, 7
    %v449 = vrot.slane %v385, 7
    %v450 = vrot.slane %v386, 7
    %v451 = vrot.slane %v387, 7
    %v452 = vrot.slane %v388, 7
    %v453 = vrot.slane %v389, 7
    %v454 = vrot.slane %v390, 7
    %v455 = vrot.slane %v391, 7
    %v456 = vrot.slane %v392, 7
    %v457 = vlaneseq
    %v458 = vshrl.u32 %v457, 7
    %vm459 = vcmp.lt.s32.totalorder %v458, 1
    %v460 = vsel %vm459, %v453, %v455
    %v461 = vsel %vm459, %v454, %v456
    %v462 = vsel %vm459, %v451, %v453
    %v463 = vsel %vm459, %v452, %v454
    %v464 = vsel %vm459, %v449, %v451
    %v465 = vsel %vm459, %v450, %v452
    %v466 = vsel %vm459, %v447, %v449
    %v467 = vsel %vm459, %v448, %v450
    %v468 = vsel %vm459, %v445, %v447
    %v469 = vsel %vm459, %v446, %v448
    %v470 = vsel %vm459, %v443, %v445
    %v471 = vsel %vm459, %v444, %v446
    %v472 = vsel %vm459, %v441, %v443
    %v473 = vsel %vm459, %v442, %v444
    %v474 = vsel %vm459, %v439, %v441
    %v475 = vsel %vm459, %v440, %v442
    %v476 = vsel %vm459, %v437, %v439
    %v477 = vsel %vm459, %v438, %v440
    %v478 = vsel %vm459, %v435, %v437
    %v479 = vsel %vm459, %v436, %v438
    %v480 = vsel %vm459, %v433, %v435
    %v481 = vsel %vm459, %v434, %v436
    %v482 = vsel %vm459, %v431, %v433
    %v483 = vsel %vm459, %v432, %v434
    %v484 = vsel %vm459, %v429, %v431
    %v485 = vsel %vm459, %v430, %v432
    %v486 = vsel %vm459, %v427, %v429
    %v487 = vsel %vm459, %v428, %v430
    %v488 = vsel %vm459, %v425, %v427
    %v489 = vsel %vm459, %v426, %v428
    %v490 = vsel %vm459, %v423, %v425
    %v491 = vsel %vm459, %v424, %v426
    %v492 = vsel %vm459, %v421, %v423
    %v493 = vsel %vm459, %v422, %v424
    %v494 = vsel %vm459, %v419, %v421
    %v495 = vsel %vm459, %v420, %v422
    %v496 = vsel %vm459, %v417, %v419
    %v497 = vsel %vm459, %v418, %v420
    %v498 = vsel %vm459, %v415, %v417
    %v499 = vsel %vm459, %v416, %v418
    %v500 = vsel %vm459, %v413, %v415
    %v501 = vsel %vm459, %v414, %v416
    %v502 = vsel %vm459, %v411, %v413
    %v503 = vsel %vm459, %v412, %v414
    %v504 = vsel %vm459, %v409, %v411
    %v505 = vsel %vm459, %v410, %v412
    %v506 = vsel %vm459, %v407, %v409
    %v507 = vsel %vm459, %v408, %v410
    %v508 = vsel %vm459, %v405, %v407
    %v509 = vsel %vm459, %v406, %v408
    %v510 = vsel %vm459, %v403, %v405
    %v511 = vsel %vm459, %v404, %v406
    %v512 = vsel %vm459, %v401, %v403
    %v513 = vsel %vm459, %v402, %v404
    %v514 = vsel %vm459, %v399, %v401
    %v515 = vsel %vm459, %v400, %v402
    %v516 = vsel %vm459, %v397, %v399
    %v517 = vsel %vm459, %v398, %v400
    %v518 = vsel %vm459, %v395, %v397
    %v519 = vsel %vm459, %v396, %v398
    %v520 = vsel %vm459, %v393, %v395
    %v521 = vsel %vm459, %v394, %v396
    %v522 = vsel %vm459, %v455, %v393
    %v523 = vsel %vm459, %v456, %v394
    %v524 = vrot.slane %v329, 1
    %v525 = vrot.slane %v330, 1
    %v526 = vrot.slane %v331, 1
    %v527 = vrot.slane %v332, 1
    %v528 = vrot.slane %v333, 1
    %v529 = vrot.slane %v334, 1
    %v530 = vrot.slane %v335, 1
    %v531 = vrot.slane %v336, 1
    %v532 = vrot.slane %v337, 1
    %v533 = vrot.slane %v338, 1
    %v534 = vrot.slane %v339, 1
    %v535 = vrot.slane %v340, 1
    %v536 = vrot.slane %v341, 1
    %v537 = vrot.slane %v342, 1
    %v538 = vrot.slane %v343, 1
    %v539 = vrot.slane %v344, 1
    %v540 = vrot.slane %v345, 1
    %v541 = vrot.slane %v346, 1
    %v542 = vrot.slane %v347, 1
    %v543 = vrot.slane %v348, 1
    %v544 = vrot.slane %v349, 1
    %v545 = vrot.slane %v350, 1
    %v546 = vrot.slane %v351, 1
    %v547 = vrot.slane %v352, 1
    %v548 = vrot.slane %v353, 1
    %v549 = vrot.slane %v354, 1
    %v550 = vrot.slane %v355, 1
    %v551 = vrot.slane %v356, 1
    %v552 = vrot.slane %v357, 1
    %v553 = vrot.slane %v358, 1
    %v554 = vrot.slane %v359, 1
    %v555 = vrot.slane %v360, 1
    %v556 = vrot.slane %v361, 1
    %v557 = vrot.slane %v362, 1
    %v558 = vrot.slane %v363, 1
    %v559 = vrot.slane %v364, 1
    %v560 = vrot.slane %v365, 1
    %v561 = vrot.slane %v366, 1
    %v562 = vrot.slane %v367, 1
    %v563 = vrot.slane %v368, 1
    %v564 = vrot.slane %v369, 1
    %v565 = vrot.slane %v370, 1
    %v566 = vrot.slane %v371, 1
    %v567 = vrot.slane %v372, 1
    %v568 = vrot.slane %v373, 1
    %v569 = vrot.slane %v374, 1
    %v570 = vrot.slane %v375, 1
    %v571 = vrot.slane %v376, 1
    %v572 = vrot.slane %v377, 1
    %v573 = vrot.slane %v378, 1
    %v574 = vrot.slane %v379, 1
    %v575 = vrot.slane %v380, 1
    %v576 = vrot.slane %v381, 1
    %v577 = vrot.slane %v382, 1
    %v578 = vrot.slane %v383, 1
    %v579 = vrot.slane %v384, 1
    %v580 = vrot.slane %v385, 1
    %v581 = vrot.slane %v386, 1
    %v582 = vrot.slane %v387, 1
    %v583 = vrot.slane %v388, 1
    %v584 = vrot.slane %v389, 1
    %v585 = vrot.slane %v390, 1
    %v586 = vrot.slane %v391, 1
    %v587 = vrot.slane %v392, 1
    %vm588 = vcmp.lt.s32.totalorder %v458, 7
    %v589 = vsel %vm588, %v584, %v586
    %v590 = vsel %vm588, %v585, %v587
    %v591 = vsel %vm588, %v582, %v584
    %v592 = vsel %vm588, %v583, %v585
    %v593 = vsel %vm588, %v580, %v582
    %v594 = vsel %vm588, %v581, %v583
    %v595 = vsel %vm588, %v578, %v580
    %v596 = vsel %vm588, %v579, %v581
    %v597 = vsel %vm588, %v576, %v578
    %v598 = vsel %vm588, %v577, %v579
    %v599 = vsel %vm588, %v574, %v576
    %v600 = vsel %vm588, %v575, %v577
    %v601 = vsel %vm588, %v572, %v574
    %v602 = vsel %vm588, %v573, %v575
    %v603 = vsel %vm588, %v570, %v572
    %v604 = vsel %vm588, %v571, %v573
    %v605 = vsel %vm588, %v568, %v570
    %v606 = vsel %vm588, %v569, %v571
    %v607 = vsel %vm588, %v566, %v568
    %v608 = vsel %vm588, %v567, %v569
    %v609 = vsel %vm588, %v564, %v566
    %v610 = vsel %vm588, %v565, %v567
    %v611 = vsel %vm588, %v562, %v564
    %v612 = vsel %vm588, %v563, %v565
    %v613 = vsel %vm588, %v560, %v562
    %v614 = vsel %vm588, %v561, %v563
    %v615 = vsel %vm588, %v558, %v560
    %v616 = vsel %vm588, %v559, %v561
    %v617 = vsel %vm588, %v556, %v558
    %v618 = vsel %vm588, %v557, %v559
    %v619 = vsel %vm588, %v554, %v556
    %v620 = vsel %vm588, %v555, %v557
    %v621 = vsel %vm588, %v552, %v554
    %v622 = vsel %vm588, %v553, %v555
    %v623 = vsel %vm588, %v550, %v552
    %v624 = vsel %vm588, %v551, %v553
    %v625 = vsel %vm588, %v548, %v550
    %v626 = vsel %vm588, %v549, %v551
    %v627 = vsel %vm588, %v546, %v548
    %v628 = vsel %vm588, %v547, %v549
    %v629 = vsel %vm588, %v544, %v546
    %v630 = vsel %vm588, %v545, %v547
    %v631 = vsel %vm588, %v542, %v544
    %v632 = vsel %vm588, %v543, %v545
    %v633 = vsel %vm588, %v540, %v542
    %v634 = vsel %vm588, %v541, %v543
    %v635 = vsel %vm588, %v538, %v540
    %v636 = vsel %vm588, %v539, %v541
    %v637 = vsel %vm588, %v536, %v538
    %v638 = vsel %vm588, %v537, %v539
    %v639 = vsel %vm588, %v534, %v536
    %v640 = vsel %vm588, %v535, %v537
    %v641 = vsel %vm588, %v532, %v534
    %v642 = vsel %vm588, %v533, %v535
    %v643 = vsel %vm588, %v530, %v532
    %v644 = vsel %vm588, %v531, %v533
    %v645 = vsel %vm588, %v528, %v530
    %v646 = vsel %vm588, %v529, %v531
    %v647 = vsel %vm588, %v526, %v528
    %v648 = vsel %vm588, %v527, %v529
    %v649 = vsel %vm588, %v524, %v526
    %v650 = vsel %vm588, %v525, %v527
    %v651 = vsel %vm588, %v586, %v524
    %v652 = vsel %vm588, %v587, %v525
    %v653 = vadd.f32 %v522, %v649
    %v654 = vadd.f32 %v523, %v650
    %v655 = vadd.f32 %v520, %v647
    %v656 = vadd.f32 %v521, %v648
    %v657 = vadd.f32 %v518, %v645
    %v658 = vadd.f32 %v519, %v646
    %v659 = vadd.f32 %v516, %v643
    %v660 = vadd.f32 %v517, %v644
    %v661 = vadd.f32 %v514, %v641
    %v662 = vadd.f32 %v515, %v642
    %v663 = vadd.f32 %v512, %v639
    %v664 = vadd.f32 %v513, %v640
    %v665 = vadd.f32 %v510, %v637
    %v666 = vadd.f32 %v511, %v638
    %v667 = vadd.f32 %v508, %v635
    %v668 = vadd.f32 %v509, %v636
    %v669 = vadd.f32 %v506, %v633
    %v670 = vadd.f32 %v507, %v634
    %v671 = vadd.f32 %v504, %v631
    %v672 = vadd.f32 %v505, %v632
    %v673 = vadd.f32 %v502, %v629
    %v674 = vadd.f32 %v503, %v630
    %v675 = vadd.f32 %v500, %v627
    %v676 = vadd.f32 %v501, %v628
    %v677 = vadd.f32 %v498, %v625
    %v678 = vadd.f32 %v499, %v626
    %v679 = vadd.f32 %v496, %v623
    %v680 = vadd.f32 %v497, %v624
    %v681 = vadd.f32 %v494, %v621
    %v682 = vadd.f32 %v495, %v622
    %v683 = vadd.f32 %v492, %v619
    %v684 = vadd.f32 %v493, %v620
    %v685 = vadd.f32 %v490, %v617
    %v686 = vadd.f32 %v491, %v618
    %v687 = vadd.f32 %v488, %v615
    %v688 = vadd.f32 %v489, %v616
    %v689 = vadd.f32 %v486, %v613
    %v690 = vadd.f32 %v487, %v614
    %v691 = vadd.f32 %v484, %v611
    %v692 = vadd.f32 %v485, %v612
    %v693 = vadd.f32 %v482, %v609
    %v694 = vadd.f32 %v483, %v610
    %v695 = vadd.f32 %v480, %v607
    %v696 = vadd.f32 %v481, %v608
    %v697 = vadd.f32 %v478, %v605
    %v698 = vadd.f32 %v479, %v606
    %v699 = vadd.f32 %v476, %v603
    %v700 = vadd.f32 %v477, %v604
    %v701 = vadd.f32 %v474, %v601
    %v702 = vadd.f32 %v475, %v602
    %v703 = vadd.f32 %v472, %v599
    %v704 = vadd.f32 %v473, %v600
    %v705 = vadd.f32 %v470, %v597
    %v706 = vadd.f32 %v471, %v598
    %v707 = vadd.f32 %v468, %v595
    %v708 = vadd.f32 %v469, %v596
    %v709 = vadd.f32 %v466, %v593
    %v710 = vadd.f32 %v467, %v594
    %v711 = vadd.f32 %v464, %v591
    %v712 = vadd.f32 %v465, %v592
    %v713 = vadd.f32 %v462, %v589
    %v714 = vadd.f32 %v463, %v590
    %v715 = vadd.f32 %v460, %v651
    %v716 = vadd.f32 %v461, %v652
    %v717 = vadd.f32 %v329, %v653
    %v718 = vadd.f32 %v330, %v654
    %v719 = vadd.f32 %v331, %v655
    %v720 = vadd.f32 %v332, %v656
    %v721 = vadd.f32 %v333, %v657
    %v722 = vadd.f32 %v334, %v658
    %v723 = vadd.f32 %v335, %v659
    %v724 = vadd.f32 %v336, %v660
    %v725 = vadd.f32 %v337, %v661
    %v726 = vadd.f32 %v338, %v662
    %v727 = vadd.f32 %v339, %v663
    %v728 = vadd.f32 %v340, %v664
    %v729 = vadd.f32 %v341, %v665
    %v730 = vadd.f32 %v342, %v666
    %v731 = vadd.f32 %v343, %v667
    %v732 = vadd.f32 %v344, %v668
    %v733 = vadd.f32 %v345, %v669
    %v734 = vadd.f32 %v346, %v670
    %v735 = vadd.f32 %v347, %v671
    %v736 = vadd.f32 %v348, %v672
    %v737 = vadd.f32 %v349, %v673
    %v738 = vadd.f32 %v350, %v674
    %v739 = vadd.f32 %v351, %v675
    %v740 = vadd.f32 %v352, %v676
    %v741 = vadd.f32 %v353, %v677
    %v742 = vadd.f32 %v354, %v678
    %v743 = vadd.f32 %v355, %v679
    %v744 = vadd.f32 %v356, %v680
    %v745 = vadd.f32 %v357, %v681
    %v746 = vadd.f32 %v358, %v682
    %v747 = vadd.f32 %v359, %v683
    %v748 = vadd.f32 %v360, %v684
    %v749 = vadd.f32 %v361, %v685
    %v750 = vadd.f32 %v362, %v686
    %v751 = vadd.f32 %v363, %v687
    %v752 = vadd.f32 %v364, %v688
    %v753 = vadd.f32 %v365, %v689
    %v754 = vadd.f32 %v366, %v690
    %v755 = vadd.f32 %v367, %v691
    %v756 = vadd.f32 %v368, %v692
    %v757 = vadd.f32 %v369, %v693
    %v758 = vadd.f32 %v370, %v694
    %v759 = vadd.f32 %v371, %v695
    %v760 = vadd.f32 %v372, %v696
    %v761 = vadd.f32 %v373, %v697
    %v762 = vadd.f32 %v374, %v698
    %v763 = vadd.f32 %v375, %v699
    %v764 = vadd.f32 %v376, %v700
    %v765 = vadd.f32 %v377, %v701
    %v766 = vadd.f32 %v378, %v702
    %v767 = vadd.f32 %v379, %v703
    %v768 = vadd.f32 %v380, %v704
    %v769 = vadd.f32 %v381, %v705
    %v770 = vadd.f32 %v382, %v706
    %v771 = vadd.f32 %v383, %v707
    %v772 = vadd.f32 %v384, %v708
    %v773 = vadd.f32 %v385, %v709
    %v774 = vadd.f32 %v386, %v710
    %v775 = vadd.f32 %v387, %v711
    %v776 = vadd.f32 %v388, %v712
    %v777 = vadd.f32 %v389, %v713
    %v778 = vadd.f32 %v390, %v714
    %v779 = vadd.f32 %v391, %v715
    %v780 = vadd.f32 %v392, %v716
    %v781 = vmul.f32 %v172, %v717
    %v782 = vmul.f32 %v172, %v718
    %v783 = vmul.f32 %v177, %v719
    %v784 = vmul.f32 %v177, %v720
    %v785 = vmul.f32 %v182, %v721
    %v786 = vmul.f32 %v182, %v722
    %v787 = vmul.f32 %v187, %v723
    %v788 = vmul.f32 %v187, %v724
    %v789 = vmul.f32 %v192, %v725
    %v790 = vmul.f32 %v192, %v726
    %v791 = vmul.f32 %v197, %v727
    %v792 = vmul.f32 %v197, %v728
    %v793 = vmul.f32 %v202, %v729
    %v794 = vmul.f32 %v202, %v730
    %v795 = vmul.f32 %v207, %v731
    %v796 = vmul.f32 %v207, %v732
    %v797 = vmul.f32 %v212, %v733
    %v798 = vmul.f32 %v212, %v734
    %v799 = vmul.f32 %v217, %v735
    %v800 = vmul.f32 %v217, %v736
    %v801 = vmul.f32 %v222, %v737
    %v802 = vmul.f32 %v222, %v738
    %v803 = vmul.f32 %v227, %v739
    %v804 = vmul.f32 %v227, %v740
    %v805 = vmul.f32 %v232, %v741
    %v806 = vmul.f32 %v232, %v742
    %v807 = vmul.f32 %v237, %v743
    %v808 = vmul.f32 %v237, %v744
    %v809 = vmul.f32 %v242, %v745
    %v810 = vmul.f32 %v242, %v746
    %v811 = vmul.f32 %v247, %v747
    %v812 = vmul.f32 %v247, %v748
    %v813 = vmul.f32 %v252, %v749
    %v814 = vmul.f32 %v252, %v750
    %v815 = vmul.f32 %v257, %v751
    %v816 = vmul.f32 %v257, %v752
    %v817 = vmul.f32 %v262, %v753
    %v818 = vmul.f32 %v262, %v754
    %v819 = vmul.f32 %v267, %v755
    %v820 = vmul.f32 %v267, %v756
    %v821 = vmul.f32 %v272, %v757
    %v822 = vmul.f32 %v272, %v758
    %v823 = vmul.f32 %v277, %v759
    %v824 = vmul.f32 %v277, %v760
    %v825 = vmul.f32 %v282, %v761
    %v826 = vmul.f32 %v282, %v762
    %v827 = vmul.f32 %v287, %v763
    %v828 = vmul.f32 %v287, %v764
    %v829 = vmul.f32 %v292, %v765
    %v830 = vmul.f32 %v292, %v766
    %v831 = vmul.f32 %v297, %v767
    %v832 = vmul.f32 %v297, %v768
    %v833 = vmul.f32 %v302, %v769
    %v834 = vmul.f32 %v302, %v770
    %v835 = vmul.f32 %v307, %v771
    %v836 = vmul.f32 %v307, %v772
    %v837 = vmul.f32 %v312, %v773
    %v838 = vmul.f32 %v312, %v774
    %v839 = vmul.f32 %v317, %v775
    %v840 = vmul.f32 %v317, %v776
    %v841 = vmul.f32 %v322, %v777
    %v842 = vmul.f32 %v322, %v778
    %v843 = vmul.f32 %v327, %v779
    %v844 = vmul.f32 %v327, %v780
    %v845 = vpack.c.bf16 %v783, %v781
    %v846 = vpack.c.bf16 %v784, %v782
    %v847 = vpack.c.bf16 %v787, %v785
    %v848 = vpack.c.bf16 %v788, %v786
    %v849 = vpack.c.bf16 %v791, %v789
    %v850 = vpack.c.bf16 %v792, %v790
    %v851 = vpack.c.bf16 %v795, %v793
    %v852 = vpack.c.bf16 %v796, %v794
    %v853 = vpack.c.bf16 %v799, %v797
    %v854 = vpack.c.bf16 %v800, %v798
    %v855 = vpack.c.bf16 %v803, %v801
    %v856 = vpack.c.bf16 %v804, %v802
    %v857 = vpack.c.bf16 %v807, %v805
    %v858 = vpack.c.bf16 %v808, %v806
    %v859 = vpack.c.bf16 %v811, %v809
    %v860 = vpack.c.bf16 %v812, %v810
    %v861 = vpack.c.bf16 %v815, %v813
    %v862 = vpack.c.bf16 %v816, %v814
    %v863 = vpack.c.bf16 %v819, %v817
    %v864 = vpack.c.bf16 %v820, %v818
    %v865 = vpack.c.bf16 %v823, %v821
    %v866 = vpack.c.bf16 %v824, %v822
    %v867 = vpack.c.bf16 %v827, %v825
    %v868 = vpack.c.bf16 %v828, %v826
    %v869 = vpack.c.bf16 %v831, %v829
    %v870 = vpack.c.bf16 %v832, %v830
    %v871 = vpack.c.bf16 %v835, %v833
    %v872 = vpack.c.bf16 %v836, %v834
    %v873 = vpack.c.bf16 %v839, %v837
    %v874 = vpack.c.bf16 %v840, %v838
    %v875 = vpack.c.bf16 %v843, %v841
    %v876 = vpack.c.bf16 %v844, %v842
    %v909 = vunpack.c.l.b16 %v121
    %v910 = vunpack.c.l.b16 %v122
    %v911 = vunpack.c.l.b16 %v123
    %v912 = vunpack.c.l.b16 %v124
    %v913 = vunpack.c.l.b16 %v125
    %v914 = vunpack.c.l.b16 %v126
    %v915 = vunpack.c.l.b16 %v127
    %v916 = vunpack.c.l.b16 %v128
    %v917 = vunpack.c.l.b16 %v129
    %v918 = vunpack.c.l.b16 %v130
    %v919 = vunpack.c.l.b16 %v131
    %v920 = vunpack.c.l.b16 %v132
    %v921 = vunpack.c.l.b16 %v133
    %v922 = vunpack.c.l.b16 %v134
    %v923 = vunpack.c.l.b16 %v135
    %v924 = vunpack.c.l.b16 %v136
    %v925 = vunpack.c.l.b16 %v137
    %v926 = vunpack.c.l.b16 %v138
    %v927 = vunpack.c.l.b16 %v139
    %v928 = vunpack.c.l.b16 %v140
    %v929 = vunpack.c.l.b16 %v141
    %v930 = vunpack.c.l.b16 %v142
    %v931 = vunpack.c.l.b16 %v143
    %v932 = vunpack.c.l.b16 %v144
    %v933 = vunpack.c.l.b16 %v145
    %v934 = vunpack.c.l.b16 %v146
    %v935 = vunpack.c.l.b16 %v147
    %v936 = vunpack.c.l.b16 %v148
    %v937 = vunpack.c.l.b16 %v149
    %v938 = vunpack.c.l.b16 %v150
    %v939 = vunpack.c.l.b16 %v151
    %v940 = vunpack.c.l.b16 %v152
    %v941 = vpack.c.b16 %v910, %v909
    %v942 = vpack.c.b16 %v912, %v911
    %v943 = vpack.c.b16 %v914, %v913
    %v944 = vpack.c.b16 %v916, %v915
    %v945 = vpack.c.b16 %v918, %v917
    %v946 = vpack.c.b16 %v920, %v919
    %v947 = vpack.c.b16 %v922, %v921
    %v948 = vpack.c.b16 %v924, %v923
    %v949 = vpack.c.b16 %v926, %v925
    %v950 = vpack.c.b16 %v928, %v927
    %v951 = vpack.c.b16 %v930, %v929
    %v952 = vpack.c.b16 %v932, %v931
    %v953 = vpack.c.b16 %v934, %v933
    %v954 = vpack.c.b16 %v936, %v935
    %v955 = vpack.c.b16 %v938, %v937
    %v956 = vpack.c.b16 %v940, %v939
    %973 = vmatprep.subr.bf16.mxu0 0
    %974 = vmatpush1.bf16.msra.mxu0 %v941
    %975 = vmatprep.subr.bf16.mxu0 0
    %976 = vmatpush1.bf16.msra.mxu0 %v942
    %977 = vmatprep.subr.bf16.mxu0 0
    %978 = vmatpush1.bf16.msra.mxu0 %v943
    %979 = vmatprep.subr.bf16.mxu0 0
    %980 = vmatpush1.bf16.msra.mxu0 %v944
    %981 = vmatprep.subr.bf16.mxu0 0
    %982 = vmatpush1.bf16.msra.mxu0 %v945
    %983 = vmatprep.subr.bf16.mxu0 0
    %984 = vmatpush1.bf16.msra.mxu0 %v946
    %985 = vmatprep.subr.bf16.mxu0 0
    %986 = vmatpush1.bf16.msra.mxu0 %v947
    %987 = vmatprep.subr.bf16.mxu0 0
    %988 = vmatpush1.bf16.msra.mxu0 %v948
    %989 = vmatprep.subr.bf16.mxu0 0
    %990 = vmatpush1.bf16.msra.mxu0 %v949
    %991 = vmatprep.subr.bf16.mxu0 0
    %992 = vmatpush1.bf16.msra.mxu0 %v950
    %993 = vmatprep.subr.bf16.mxu0 0
    %994 = vmatpush1.bf16.msra.mxu0 %v951
    %995 = vmatprep.subr.bf16.mxu0 0
    %996 = vmatpush1.bf16.msra.mxu0 %v952
    %997 = vmatprep.subr.bf16.mxu0 0
    %998 = vmatpush1.bf16.msra.mxu0 %v953
    %999 = vmatprep.subr.bf16.mxu0 0
    %1000 = vmatpush1.bf16.msra.mxu0 %v954
    %1001 = vmatprep.subr.bf16.mxu0 0
    %1002 = vmatpush1.bf16.msra.mxu0 %v955
    %1003 = vmatprep.subr.bf16.mxu0 0
    %1004 = vmatpush1.bf16.msra.mxu0 %v956
    %1005 = vmatprep.mubr.bf16.mxu0 %v846
    %1006 = vmatmul.mubr.bf16.gmra.mrb[0].mxu0 %v845
    %v1007 = vpop.f32.mrb[0].mxu0
    %v1008 = vadd.f32 0.0, %v1007
    %v1009 = vpop.f32.mrb[0].mxu0
    %v1010 = vpop.f32.mrb[0].mxu0
    %v1011 = vadd.f32 0.0, %v1010
    %v1012 = vpop.f32.mrb[0].mxu0
    %1013 = vmatprep.mubr.bf16.mxu0 %v848
    %1014 = vmatmul.mubr.bf16.gmra.mrb[0].mxu0 %v847
    %v1015 = vpop.f32.mrb[0].mxu0
    %v1016 = vadd.f32 0.0, %v1015
    %v1017 = vpop.f32.mrb[0].mxu0
    %v1018 = vpop.f32.mrb[0].mxu0
    %v1019 = vadd.f32 0.0, %v1018
    %v1020 = vpop.f32.mrb[0].mxu0
    %1021 = vmatprep.mubr.bf16.mxu0 %v850
    %1022 = vmatmul.mubr.bf16.gmra.mrb[0].mxu0 %v849
    %v1023 = vpop.f32.mrb[0].mxu0
    %v1024 = vadd.f32 0.0, %v1023
    %v1025 = vpop.f32.mrb[0].mxu0
    %v1026 = vpop.f32.mrb[0].mxu0
    %v1027 = vadd.f32 0.0, %v1026
    %v1028 = vpop.f32.mrb[0].mxu0
    %1029 = vmatprep.mubr.bf16.mxu0 %v852
    %1030 = vmatmul.mubr.bf16.gmra.mrb[0].mxu0 %v851
    %v1031 = vpop.f32.mrb[0].mxu0
    %v1032 = vadd.f32 0.0, %v1031
    %v1033 = vpop.f32.mrb[0].mxu0
    %v1034 = vpop.f32.mrb[0].mxu0
    %v1035 = vadd.f32 0.0, %v1034
    %v1036 = vpop.f32.mrb[0].mxu0
    %1037 = vmatprep.mubr.bf16.mxu0 %v854
    %1038 = vmatmul.mubr.bf16.gmra.mrb[0].mxu0 %v853
    %v1039 = vpop.f32.mrb[0].mxu0
    %v1040 = vadd.f32 0.0, %v1039
    %v1041 = vpop.f32.mrb[0].mxu0
    %v1042 = vpop.f32.mrb[0].mxu0
    %v1043 = vadd.f32 0.0, %v1042
    %v1044 = vpop.f32.mrb[0].mxu0
    %1045 = vmatprep.mubr.bf16.mxu0 %v856
    %1046 = vmatmul.mubr.bf16.gmra.mrb[0].mxu0 %v855
    %v1047 = vpop.f32.mrb[0].mxu0
    %v1048 = vadd.f32 0.0, %v1047
    %v1049 = vpop.f32.mrb[0].mxu0
    %v1050 = vpop.f32.mrb[0].mxu0
    %v1051 = vadd.f32 0.0, %v1050
    %v1052 = vpop.f32.mrb[0].mxu0
    %1053 = vmatprep.mubr.bf16.mxu0 %v858
    %1054 = vmatmul.mubr.bf16.gmra.mrb[0].mxu0 %v857
    %v1055 = vpop.f32.mrb[0].mxu0
    %v1056 = vadd.f32 0.0, %v1055
    %v1057 = vpop.f32.mrb[0].mxu0
    %v1058 = vpop.f32.mrb[0].mxu0
    %v1059 = vadd.f32 0.0, %v1058
    %v1060 = vpop.f32.mrb[0].mxu0
    %1061 = vmatprep.mubr.bf16.mxu0 %v860
    %1062 = vmatmul.mubr.bf16.gmra.mrb[0].mxu0 %v859
    %v1063 = vpop.f32.mrb[0].mxu0
    %v1064 = vadd.f32 0.0, %v1063
    %v1065 = vpop.f32.mrb[0].mxu0
    %v1066 = vpop.f32.mrb[0].mxu0
    %v1067 = vadd.f32 0.0, %v1066
    %v1068 = vpop.f32.mrb[0].mxu0
    %1069 = vmatprep.mubr.bf16.mxu0 %v862
    %1070 = vmatmul.mubr.bf16.gmra.mrb[0].mxu0 %v861
    %v1071 = vpop.f32.mrb[0].mxu0
    %v1072 = vadd.f32 0.0, %v1071
    %v1073 = vpop.f32.mrb[0].mxu0
    %v1074 = vpop.f32.mrb[0].mxu0
    %v1075 = vadd.f32 0.0, %v1074
    %v1076 = vpop.f32.mrb[0].mxu0
    %1077 = vmatprep.mubr.bf16.mxu0 %v864
    %1078 = vmatmul.mubr.bf16.gmra.mrb[0].mxu0 %v863
    %v1079 = vpop.f32.mrb[0].mxu0
    %v1080 = vadd.f32 0.0, %v1079
    %v1081 = vpop.f32.mrb[0].mxu0
    %v1082 = vpop.f32.mrb[0].mxu0
    %v1083 = vadd.f32 0.0, %v1082
    %v1084 = vpop.f32.mrb[0].mxu0
    %1085 = vmatprep.mubr.bf16.mxu0 %v866
    %1086 = vmatmul.mubr.bf16.gmra.mrb[0].mxu0 %v865
    %v1087 = vpop.f32.mrb[0].mxu0
    %v1088 = vadd.f32 0.0, %v1087
    %v1089 = vpop.f32.mrb[0].mxu0
    %v1090 = vpop.f32.mrb[0].mxu0
    %v1091 = vadd.f32 0.0, %v1090
    %v1092 = vpop.f32.mrb[0].mxu0
    %1093 = vmatprep.mubr.bf16.mxu0 %v868
    %1094 = vmatmul.mubr.bf16.gmra.mrb[0].mxu0 %v867
    %v1095 = vpop.f32.mrb[0].mxu0
    %v1096 = vadd.f32 0.0, %v1095
    %v1097 = vpop.f32.mrb[0].mxu0
    %v1098 = vpop.f32.mrb[0].mxu0
    %v1099 = vadd.f32 0.0, %v1098
    %v1100 = vpop.f32.mrb[0].mxu0
    %1101 = vmatprep.mubr.bf16.mxu0 %v870
    %1102 = vmatmul.mubr.bf16.gmra.mrb[0].mxu0 %v869
    %v1103 = vpop.f32.mrb[0].mxu0
    %v1104 = vadd.f32 0.0, %v1103
    %v1105 = vpop.f32.mrb[0].mxu0
    %v1106 = vpop.f32.mrb[0].mxu0
    %v1107 = vadd.f32 0.0, %v1106
    %v1108 = vpop.f32.mrb[0].mxu0
    %1109 = vmatprep.mubr.bf16.mxu0 %v872
    %1110 = vmatmul.mubr.bf16.gmra.mrb[0].mxu0 %v871
    %v1111 = vpop.f32.mrb[0].mxu0
    %v1112 = vadd.f32 0.0, %v1111
    %v1113 = vpop.f32.mrb[0].mxu0
    %v1114 = vpop.f32.mrb[0].mxu0
    %v1115 = vadd.f32 0.0, %v1114
    %v1116 = vpop.f32.mrb[0].mxu0
    %1117 = vmatprep.mubr.bf16.mxu0 %v874
    %1118 = vmatmul.mubr.bf16.gmra.mrb[0].mxu0 %v873
    %v1119 = vpop.f32.mrb[0].mxu0
    %v1120 = vadd.f32 0.0, %v1119
    %v1121 = vpop.f32.mrb[0].mxu0
    %v1122 = vpop.f32.mrb[0].mxu0
    %v1123 = vadd.f32 0.0, %v1122
    %v1124 = vpop.f32.mrb[0].mxu0
    %1125 = vmatprep.mubr.bf16.mxu0 %v876
    %1126 = vmatmul.mubr.bf16.gmra.mrb[0].mxu0 %v875
    %v1127 = vpop.f32.mrb[0].mxu0
    %v1128 = vadd.f32 0.0, %v1127
    %v1129 = vpop.f32.mrb[0].mxu0
    %v1130 = vpop.f32.mrb[0].mxu0
    %v1131 = vadd.f32 0.0, %v1130
    %v1132 = vpop.f32.mrb[0].mxu0
    %1133 = vdwg.mxu0
    %v1134 = vmax.f32 %v1008, 0.0
    %v1135 = vmax.f32 %v1011, 0.0
    %v1136 = vmax.f32 %v1016, 0.0
    %v1137 = vmax.f32 %v1019, 0.0
    %v1138 = vmax.f32 %v1024, 0.0
    %v1139 = vmax.f32 %v1027, 0.0
    %v1140 = vmax.f32 %v1032, 0.0
    %v1141 = vmax.f32 %v1035, 0.0
    %v1142 = vmax.f32 %v1040, 0.0
    %v1143 = vmax.f32 %v1043, 0.0
    %v1144 = vmax.f32 %v1048, 0.0
    %v1145 = vmax.f32 %v1051, 0.0
    %v1146 = vmax.f32 %v1056, 0.0
    %v1147 = vmax.f32 %v1059, 0.0
    %v1148 = vmax.f32 %v1064, 0.0
    %v1149 = vmax.f32 %v1067, 0.0
    %v1150 = vmax.f32 %v1072, 0.0
    %v1151 = vmax.f32 %v1075, 0.0
    %v1152 = vmax.f32 %v1080, 0.0
    %v1153 = vmax.f32 %v1083, 0.0
    %v1154 = vmax.f32 %v1088, 0.0
    %v1155 = vmax.f32 %v1091, 0.0
    %v1156 = vmax.f32 %v1096, 0.0
    %v1157 = vmax.f32 %v1099, 0.0
    %v1158 = vmax.f32 %v1104, 0.0
    %v1159 = vmax.f32 %v1107, 0.0
    %v1160 = vmax.f32 %v1112, 0.0
    %v1161 = vmax.f32 %v1115, 0.0
    %v1162 = vmax.f32 %v1120, 0.0
    %v1163 = vmax.f32 %v1123, 0.0
    %v1164 = vmax.f32 %v1128, 0.0
    %v1165 = vmax.f32 %v1131, 0.0
    %v1166 = vpack.c.bf16 %v1135, %v1134
    %v1167 = vpack.c.bf16 %v1137, %v1136
    %v1168 = vpack.c.bf16 %v1139, %v1138
    %v1169 = vpack.c.bf16 %v1141, %v1140
    %v1170 = vpack.c.bf16 %v1143, %v1142
    %v1171 = vpack.c.bf16 %v1145, %v1144
    %v1172 = vpack.c.bf16 %v1147, %v1146
    %v1173 = vpack.c.bf16 %v1149, %v1148
    %v1174 = vpack.c.bf16 %v1151, %v1150
    %v1175 = vpack.c.bf16 %v1153, %v1152
    %v1176 = vpack.c.bf16 %v1155, %v1154
    %v1177 = vpack.c.bf16 %v1157, %v1156
    %v1178 = vpack.c.bf16 %v1159, %v1158
    %v1179 = vpack.c.bf16 %v1161, %v1160
    %v1180 = vpack.c.bf16 %v1163, %v1162
    %v1181 = vpack.c.bf16 %v1165, %v1164
    %v1198 = vunpack.c.l.b16 %v153
    %v1199 = vunpack.c.l.b16 %v154
    %v1200 = vunpack.c.l.b16 %v155
    %v1201 = vunpack.c.l.b16 %v156
    %v1202 = vunpack.c.l.b16 %v157
    %v1203 = vunpack.c.l.b16 %v158
    %v1204 = vunpack.c.l.b16 %v159
    %v1205 = vunpack.c.l.b16 %v160
    %v1206 = vunpack.c.l.b16 %v161
    %v1207 = vunpack.c.l.b16 %v162
    %v1208 = vunpack.c.l.b16 %v163
    %v1209 = vunpack.c.l.b16 %v164
    %v1210 = vunpack.c.l.b16 %v165
    %v1211 = vunpack.c.l.b16 %v166
    %v1212 = vunpack.c.l.b16 %v167
    %v1213 = vunpack.c.l.b16 %v168
    %v1214 = vpack.c.b16 %v1199, %v1198
    %v1215 = vpack.c.b16 %v1201, %v1200
    %v1216 = vpack.c.b16 %v1203, %v1202
    %v1217 = vpack.c.b16 %v1205, %v1204
    %v1218 = vpack.c.b16 %v1207, %v1206
    %v1219 = vpack.c.b16 %v1209, %v1208
    %v1220 = vpack.c.b16 %v1211, %v1210
    %v1221 = vpack.c.b16 %v1213, %v1212
    %1230 = vmatprep.subr.bf16.mxu0 0
    %1231 = vmatpush1.bf16.msra.mxu0 %v1214
    %1232 = vmatprep.subr.bf16.mxu0 0
    %1233 = vmatpush1.bf16.msra.mxu0 %v1215
    %1234 = vmatprep.subr.bf16.mxu0 0
    %1235 = vmatpush1.bf16.msra.mxu0 %v1216
    %1236 = vmatprep.subr.bf16.mxu0 0
    %1237 = vmatpush1.bf16.msra.mxu0 %v1217
    %1238 = vmatprep.subr.bf16.mxu0 0
    %1239 = vmatpush1.bf16.msra.mxu0 %v1218
    %1240 = vmatprep.subr.bf16.mxu0 0
    %1241 = vmatpush1.bf16.msra.mxu0 %v1219
    %1242 = vmatprep.subr.bf16.mxu0 0
    %1243 = vmatpush1.bf16.msra.mxu0 %v1220
    %1244 = vmatprep.subr.bf16.mxu0 0
    %1245 = vmatpush1.bf16.msra.mxu0 %v1221
    %1246 = vmatprep.subr.bf16.mxu0 0
    %1247 = vmatpush1.bf16.msra.mxu0 0
    %1248 = vmatprep.subr.bf16.mxu0 0
    %1249 = vmatpush1.bf16.msra.mxu0 0
    %1250 = vmatprep.subr.bf16.mxu0 0
    %1251 = vmatpush1.bf16.msra.mxu0 0
    %1252 = vmatprep.subr.bf16.mxu0 0
    %1253 = vmatpush1.bf16.msra.mxu0 0
    %1254 = vmatprep.subr.bf16.mxu0 0
    %1255 = vmatpush1.bf16.msra.mxu0 0
    %1256 = vmatprep.subr.bf16.mxu0 0
    %1257 = vmatpush1.bf16.msra.mxu0 0
    %1258 = vmatprep.subr.bf16.mxu0 0
    %1259 = vmatpush1.bf16.msra.mxu0 0
    %1260 = vmatprep.subr.bf16.mxu0 0
    %1261 = vmatpush1.bf16.msra.mxu0 0
    %1262 = vmatprep.mubr.bf16.mxu0 0
    %1263 = vmatmul.mubr.bf16.gmra.mrb[0].mxu0 %v1166
    %v1264 = vpop.f32.mrb[0].mxu0
    %v1265 = vadd.f32 0.0, %v1264
    %v1266 = vpop.f32.mrb[0].mxu0
    %v1267 = vpop.f32.mrb[0].mxu0
    %v1268 = vadd.f32 0.0, %v1267
    %v1269 = vpop.f32.mrb[0].mxu0
    %1270 = vmatprep.mubr.bf16.mxu0 0
    %1271 = vmatmul.mubr.bf16.gmra.mrb[0].mxu0 %v1167
    %v1272 = vpop.f32.mrb[0].mxu0
    %v1273 = vadd.f32 0.0, %v1272
    %v1274 = vpop.f32.mrb[0].mxu0
    %v1275 = vpop.f32.mrb[0].mxu0
    %v1276 = vadd.f32 0.0, %v1275
    %v1277 = vpop.f32.mrb[0].mxu0
    %1278 = vmatprep.mubr.bf16.mxu0 0
    %1279 = vmatmul.mubr.bf16.gmra.mrb[0].mxu0 %v1168
    %v1280 = vpop.f32.mrb[0].mxu0
    %v1281 = vadd.f32 0.0, %v1280
    %v1282 = vpop.f32.mrb[0].mxu0
    %v1283 = vpop.f32.mrb[0].mxu0
    %v1284 = vadd.f32 0.0, %v1283
    %v1285 = vpop.f32.mrb[0].mxu0
    %1286 = vmatprep.mubr.bf16.mxu0 0
    %1287 = vmatmul.mubr.bf16.gmra.mrb[0].mxu0 %v1169
    %v1288 = vpop.f32.mrb[0].mxu0
    %v1289 = vadd.f32 0.0, %v1288
    %v1290 = vpop.f32.mrb[0].mxu0
    %v1291 = vpop.f32.mrb[0].mxu0
    %v1292 = vadd.f32 0.0, %v1291
    %v1293 = vpop.f32.mrb[0].mxu0
    %1294 = vmatprep.mubr.bf16.mxu0 0
    %1295 = vmatmul.mubr.bf16.gmra.mrb[0].mxu0 %v1170
    %v1296 = vpop.f32.mrb[0].mxu0
    %v1297 = vadd.f32 0.0, %v1296
    %v1298 = vpop.f32.mrb[0].mxu0
    %v1299 = vpop.f32.mrb[0].mxu0
    %v1300 = vadd.f32 0.0, %v1299
    %v1301 = vpop.f32.mrb[0].mxu0
    %1302 = vmatprep.mubr.bf16.mxu0 0
    %1303 = vmatmul.mubr.bf16.gmra.mrb[0].mxu0 %v1171
    %v1304 = vpop.f32.mrb[0].mxu0
    %v1305 = vadd.f32 0.0, %v1304
    %v1306 = vpop.f32.mrb[0].mxu0
    %v1307 = vpop.f32.mrb[0].mxu0
    %v1308 = vadd.f32 0.0, %v1307
    %v1309 = vpop.f32.mrb[0].mxu0
    %1310 = vmatprep.mubr.bf16.mxu0 0
    %1311 = vmatmul.mubr.bf16.gmra.mrb[0].mxu0 %v1172
    %v1312 = vpop.f32.mrb[0].mxu0
    %v1313 = vadd.f32 0.0, %v1312
    %v1314 = vpop.f32.mrb[0].mxu0
    %v1315 = vpop.f32.mrb[0].mxu0
    %v1316 = vadd.f32 0.0, %v1315
    %v1317 = vpop.f32.mrb[0].mxu0
    %1318 = vmatprep.mubr.bf16.mxu0 0
    %1319 = vmatmul.mubr.bf16.gmra.mrb[0].mxu0 %v1173
    %v1320 = vpop.f32.mrb[0].mxu0
    %v1321 = vadd.f32 0.0, %v1320
    %v1322 = vpop.f32.mrb[0].mxu0
    %v1323 = vpop.f32.mrb[0].mxu0
    %v1324 = vadd.f32 0.0, %v1323
    %v1325 = vpop.f32.mrb[0].mxu0
    %1326 = vmatprep.mubr.bf16.mxu0 0
    %1327 = vmatmul.mubr.bf16.gmra.mrb[0].mxu0 %v1174
    %v1328 = vpop.f32.mrb[0].mxu0
    %v1329 = vadd.f32 0.0, %v1328
    %v1330 = vpop.f32.mrb[0].mxu0
    %v1331 = vpop.f32.mrb[0].mxu0
    %v1332 = vadd.f32 0.0, %v1331
    %v1333 = vpop.f32.mrb[0].mxu0
    %1334 = vmatprep.mubr.bf16.mxu0 0
    %1335 = vmatmul.mubr.bf16.gmra.mrb[0].mxu0 %v1175
    %v1336 = vpop.f32.mrb[0].mxu0
    %v1337 = vadd.f32 0.0, %v1336
    %v1338 = vpop.f32.mrb[0].mxu0
    %v1339 = vpop.f32.mrb[0].mxu0
    %v1340 = vadd.f32 0.0, %v1339
    %v1341 = vpop.f32.mrb[0].mxu0
    %1342 = vmatprep.mubr.bf16.mxu0 0
    %1343 = vmatmul.mubr.bf16.gmra.mrb[0].mxu0 %v1176
    %v1344 = vpop.f32.mrb[0].mxu0
    %v1345 = vadd.f32 0.0, %v1344
    %v1346 = vpop.f32.mrb[0].mxu0
    %v1347 = vpop.f32.mrb[0].mxu0
    %v1348 = vadd.f32 0.0, %v1347
    %v1349 = vpop.f32.mrb[0].mxu0
    %1350 = vmatprep.mubr.bf16.mxu0 0
    %1351 = vmatmul.mubr.bf16.gmra.mrb[0].mxu0 %v1177
    %v1352 = vpop.f32.mrb[0].mxu0
    %v1353 = vadd.f32 0.0, %v1352
    %v1354 = vpop.f32.mrb[0].mxu0
    %v1355 = vpop.f32.mrb[0].mxu0
    %v1356 = vadd.f32 0.0, %v1355
    %v1357 = vpop.f32.mrb[0].mxu0
    %1358 = vmatprep.mubr.bf16.mxu0 0
    %1359 = vmatmul.mubr.bf16.gmra.mrb[0].mxu0 %v1178
    %v1360 = vpop.f32.mrb[0].mxu0
    %v1361 = vadd.f32 0.0, %v1360
    %v1362 = vpop.f32.mrb[0].mxu0
    %v1363 = vpop.f32.mrb[0].mxu0
    %v1364 = vadd.f32 0.0, %v1363
    %v1365 = vpop.f32.mrb[0].mxu0
    %1366 = vmatprep.mubr.bf16.mxu0 0
    %1367 = vmatmul.mubr.bf16.gmra.mrb[0].mxu0 %v1179
    %v1368 = vpop.f32.mrb[0].mxu0
    %v1369 = vadd.f32 0.0, %v1368
    %v1370 = vpop.f32.mrb[0].mxu0
    %v1371 = vpop.f32.mrb[0].mxu0
    %v1372 = vadd.f32 0.0, %v1371
    %v1373 = vpop.f32.mrb[0].mxu0
    %1374 = vmatprep.mubr.bf16.mxu0 0
    %1375 = vmatmul.mubr.bf16.gmra.mrb[0].mxu0 %v1180
    %v1376 = vpop.f32.mrb[0].mxu0
    %v1377 = vadd.f32 0.0, %v1376
    %v1378 = vpop.f32.mrb[0].mxu0
    %v1379 = vpop.f32.mrb[0].mxu0
    %v1380 = vadd.f32 0.0, %v1379
    %v1381 = vpop.f32.mrb[0].mxu0
    %1382 = vmatprep.mubr.bf16.mxu0 0
    %1383 = vmatmul.mubr.bf16.gmra.mrb[0].mxu0 %v1181
    %v1384 = vpop.f32.mrb[0].mxu0
    %v1385 = vadd.f32 0.0, %v1384
    %v1386 = vpop.f32.mrb[0].mxu0
    %v1387 = vpop.f32.mrb[0].mxu0
    %v1388 = vadd.f32 0.0, %v1387
    %v1389 = vpop.f32.mrb[0].mxu0
    %1390 = vdwg.mxu0
    %v1391 = vmax.f32 %v1265, 0.0
    %v1392 = vmax.f32 %v1268, 0.0
    %v1393 = vmax.f32 %v1273, 0.0
    %v1394 = vmax.f32 %v1276, 0.0
    %v1395 = vmax.f32 %v1281, 0.0
    %v1396 = vmax.f32 %v1284, 0.0
    %v1397 = vmax.f32 %v1289, 0.0
    %v1398 = vmax.f32 %v1292, 0.0
    %v1399 = vmax.f32 %v1297, 0.0
    %v1400 = vmax.f32 %v1300, 0.0
    %v1401 = vmax.f32 %v1305, 0.0
    %v1402 = vmax.f32 %v1308, 0.0
    %v1403 = vmax.f32 %v1313, 0.0
    %v1404 = vmax.f32 %v1316, 0.0
    %v1405 = vmax.f32 %v1321, 0.0
    %v1406 = vmax.f32 %v1324, 0.0
    %v1407 = vmax.f32 %v1329, 0.0
    %v1408 = vmax.f32 %v1332, 0.0
    %v1409 = vmax.f32 %v1337, 0.0
    %v1410 = vmax.f32 %v1340, 0.0
    %v1411 = vmax.f32 %v1345, 0.0
    %v1412 = vmax.f32 %v1348, 0.0
    %v1413 = vmax.f32 %v1353, 0.0
    %v1414 = vmax.f32 %v1356, 0.0
    %v1415 = vmax.f32 %v1361, 0.0
    %v1416 = vmax.f32 %v1364, 0.0
    %v1417 = vmax.f32 %v1369, 0.0
    %v1418 = vmax.f32 %v1372, 0.0
    %v1419 = vmax.f32 %v1377, 0.0
    %v1420 = vmax.f32 %v1380, 0.0
    %v1421 = vmax.f32 %v1385, 0.0
    %v1422 = vmax.f32 %v1388, 0.0
    %v1423 = vld [vmem:[%s2 + $0xc0] sm:$0xf]
    %v1424 = vld [vmem:[%s2 + $0xc4] sm:$0xf]
    %v1425 = vld [vmem:[%s2 + $0xc8] sm:$0xf]
    %v1426 = vld [vmem:[%s2 + $0xcc] sm:$0xf]
    %v1427 = vld [vmem:[%s2 + $0xd0] sm:$0xf]
    %v1428 = vld [vmem:[%s2 + $0xd4] sm:$0xf]
    %v1429 = vld [vmem:[%s2 + $0xd8] sm:$0xf]
    %v1430 = vld [vmem:[%s2 + $0xdc] sm:$0xf]
    %v1431 = vld [vmem:[%s2 + $0xe0] sm:$0xf]
    %v1432 = vld [vmem:[%s2 + $0xe4] sm:$0xf]
    %v1433 = vld [vmem:[%s2 + $0xe8] sm:$0xf]
    %v1434 = vld [vmem:[%s2 + $0xec] sm:$0xf]
    %v1435 = vld [vmem:[%s2 + $0xf0] sm:$0xf]
    %v1436 = vld [vmem:[%s2 + $0xf4] sm:$0xf]
    %v1437 = vld [vmem:[%s2 + $0xf8] sm:$0xf]
    %v1438 = vld [vmem:[%s2 + $0xfc] sm:$0xf]
    %v1439 = vld [vmem:[%s2 + $0x100] sm:$0xf]
    %v1440 = vld [vmem:[%s2 + $0x104] sm:$0xf]
    %v1441 = vld [vmem:[%s2 + $0x108] sm:$0xf]
    %v1442 = vld [vmem:[%s2 + $0x10c] sm:$0xf]
    %v1443 = vld [vmem:[%s2 + $0x110] sm:$0xf]
    %v1444 = vld [vmem:[%s2 + $0x114] sm:$0xf]
    %v1445 = vld [vmem:[%s2 + $0x118] sm:$0xf]
    %v1446 = vld [vmem:[%s2 + $0x11c] sm:$0xf]
    %v1447 = vld [vmem:[%s2 + $0x120] sm:$0xf]
    %v1448 = vld [vmem:[%s2 + $0x124] sm:$0xf]
    %v1449 = vld [vmem:[%s2 + $0x128] sm:$0xf]
    %v1450 = vld [vmem:[%s2 + $0x12c] sm:$0xf]
    %v1451 = vld [vmem:[%s2 + $0x130] sm:$0xf]
    %v1452 = vld [vmem:[%s2 + $0x134] sm:$0xf]
    %v1453 = vld [vmem:[%s2 + $0x138] sm:$0xf]
    %v1454 = vld [vmem:[%s2 + $0x13c] sm:$0xf]
    %v1455 = vmul.f32 %v172, %v1391
    %v1456 = vmul.f32 %v177, %v1392
    %v1457 = vmul.f32 %v182, %v1393
    %v1458 = vmul.f32 %v187, %v1394
    %v1459 = vmul.f32 %v192, %v1395
    %v1460 = vmul.f32 %v197, %v1396
    %v1461 = vmul.f32 %v202, %v1397
    %v1462 = vmul.f32 %v207, %v1398
    %v1463 = vmul.f32 %v212, %v1399
    %v1464 = vmul.f32 %v217, %v1400
    %v1465 = vmul.f32 %v222, %v1401
    %v1466 = vmul.f32 %v227, %v1402
    %v1467 = vmul.f32 %v232, %v1403
    %v1468 = vmul.f32 %v237, %v1404
    %v1469 = vmul.f32 %v242, %v1405
    %v1470 = vmul.f32 %v247, %v1406
    %v1471 = vmul.f32 %v252, %v1407
    %v1472 = vmul.f32 %v257, %v1408
    %v1473 = vmul.f32 %v262, %v1409
    %v1474 = vmul.f32 %v267, %v1410
    %v1475 = vmul.f32 %v272, %v1411
    %v1476 = vmul.f32 %v277, %v1412
    %v1477 = vmul.f32 %v282, %v1413
    %v1478 = vmul.f32 %v287, %v1414
    %v1479 = vmul.f32 %v292, %v1415
    %v1480 = vmul.f32 %v297, %v1416
    %v1481 = vmul.f32 %v302, %v1417
    %v1482 = vmul.f32 %v307, %v1418
    %v1483 = vmul.f32 %v312, %v1419
    %v1484 = vmul.f32 %v317, %v1420
    %v1485 = vmul.f32 %v322, %v1421
    %v1486 = vmul.f32 %v327, %v1422
    %v1487 = vrot.slane %v1455, 7
    %v1488 = vrot.slane %v1456, 7
    %v1489 = vrot.slane %v1457, 7
    %v1490 = vrot.slane %v1458, 7
    %v1491 = vrot.slane %v1459, 7
    %v1492 = vrot.slane %v1460, 7
    %v1493 = vrot.slane %v1461, 7
    %v1494 = vrot.slane %v1462, 7
    %v1495 = vrot.slane %v1463, 7
    %v1496 = vrot.slane %v1464, 7
    %v1497 = vrot.slane %v1465, 7
    %v1498 = vrot.slane %v1466, 7
    %v1499 = vrot.slane %v1467, 7
    %v1500 = vrot.slane %v1468, 7
    %v1501 = vrot.slane %v1469, 7
    %v1502 = vrot.slane %v1470, 7
    %v1503 = vrot.slane %v1471, 7
    %v1504 = vrot.slane %v1472, 7
    %v1505 = vrot.slane %v1473, 7
    %v1506 = vrot.slane %v1474, 7
    %v1507 = vrot.slane %v1475, 7
    %v1508 = vrot.slane %v1476, 7
    %v1509 = vrot.slane %v1477, 7
    %v1510 = vrot.slane %v1478, 7
    %v1511 = vrot.slane %v1479, 7
    %v1512 = vrot.slane %v1480, 7
    %v1513 = vrot.slane %v1481, 7
    %v1514 = vrot.slane %v1482, 7
    %v1515 = vrot.slane %v1483, 7
    %v1516 = vrot.slane %v1484, 7
    %v1517 = vrot.slane %v1485, 7
    %v1518 = vrot.slane %v1486, 7
    %v1519 = vsel %vm459, %v1517, %v1518
    %v1520 = vsel %vm459, %v1516, %v1517
    %v1521 = vsel %vm459, %v1515, %v1516
    %v1522 = vsel %vm459, %v1514, %v1515
    %v1523 = vsel %vm459, %v1513, %v1514
    %v1524 = vsel %vm459, %v1512, %v1513
    %v1525 = vsel %vm459, %v1511, %v1512
    %v1526 = vsel %vm459, %v1510, %v1511
    %v1527 = vsel %vm459, %v1509, %v1510
    %v1528 = vsel %vm459, %v1508, %v1509
    %v1529 = vsel %vm459, %v1507, %v1508
    %v1530 = vsel %vm459, %v1506, %v1507
    %v1531 = vsel %vm459, %v1505, %v1506
    %v1532 = vsel %vm459, %v1504, %v1505
    %v1533 = vsel %vm459, %v1503, %v1504
    %v1534 = vsel %vm459, %v1502, %v1503
    %v1535 = vsel %vm459, %v1501, %v1502
    %v1536 = vsel %vm459, %v1500, %v1501
    %v1537 = vsel %vm459, %v1499, %v1500
    %v1538 = vsel %vm459, %v1498, %v1499
    %v1539 = vsel %vm459, %v1497, %v1498
    %v1540 = vsel %vm459, %v1496, %v1497
    %v1541 = vsel %vm459, %v1495, %v1496
    %v1542 = vsel %vm459, %v1494, %v1495
    %v1543 = vsel %vm459, %v1493, %v1494
    %v1544 = vsel %vm459, %v1492, %v1493
    %v1545 = vsel %vm459, %v1491, %v1492
    %v1546 = vsel %vm459, %v1490, %v1491
    %v1547 = vsel %vm459, %v1489, %v1490
    %v1548 = vsel %vm459, %v1488, %v1489
    %v1549 = vsel %vm459, %v1487, %v1488
    %v1550 = vsel %vm459, %v1518, %v1487
    %v1551 = vrot.slane %v1455, 1
    %v1552 = vrot.slane %v1456, 1
    %v1553 = vrot.slane %v1457, 1
    %v1554 = vrot.slane %v1458, 1
    %v1555 = vrot.slane %v1459, 1
    %v1556 = vrot.slane %v1460, 1
    %v1557 = vrot.slane %v1461, 1
    %v1558 = vrot.slane %v1462, 1
    %v1559 = vrot.slane %v1463, 1
    %v1560 = vrot.slane %v1464, 1
    %v1561 = vrot.slane %v1465, 1
    %v1562 = vrot.slane %v1466, 1
    %v1563 = vrot.slane %v1467, 1
    %v1564 = vrot.slane %v1468, 1
    %v1565 = vrot.slane %v1469, 1
    %v1566 = vrot.slane %v1470, 1
    %v1567 = vrot.slane %v1471, 1
    %v1568 = vrot.slane %v1472, 1
    %v1569 = vrot.slane %v1473, 1
    %v1570 = vrot.slane %v1474, 1
    %v1571 = vrot.slane %v1475, 1
    %v1572 = vrot.slane %v1476, 1
    %v1573 = vrot.slane %v1477, 1
    %v1574 = vrot.slane %v1478, 1
    %v1575 = vrot.slane %v1479, 1
    %v1576 = vrot.slane %v1480, 1
    %v1577 = vrot.slane %v1481, 1
    %v1578 = vrot.slane %v1482, 1
    %v1579 = vrot.slane %v1483, 1
    %v1580 = vrot.slane %v1484, 1
    %v1581 = vrot.slane %v1485, 1
    %v1582 = vrot.slane %v1486, 1
    %v1583 = vsel %vm588, %v1581, %v1582
    %v1584 = vsel %vm588, %v1580, %v1581
    %v1585 = vsel %vm588, %v1579, %v1580
    %v1586 = vsel %vm588, %v1578, %v1579
    %v1587 = vsel %vm588, %v1577, %v1578
    %v1588 = vsel %vm588, %v1576, %v1577
    %v1589 = vsel %vm588, %v1575, %v1576
    %v1590 = vsel %vm588, %v1574, %v1575
    %v1591 = vsel %vm588, %v1573, %v1574
    %v1592 = vsel %vm588, %v1572, %v1573
    %v1593 = vsel %vm588, %v1571, %v1572
    %v1594 = vsel %vm588, %v1570, %v1571
    %v1595 = vsel %vm588, %v1569, %v1570
    %v1596 = vsel %vm588, %v1568, %v1569
    %v1597 = vsel %vm588, %v1567, %v1568
    %v1598 = vsel %vm588, %v1566, %v1567
    %v1599 = vsel %vm588, %v1565, %v1566
    %v1600 = vsel %vm588, %v1564, %v1565
    %v1601 = vsel %vm588, %v1563, %v1564
    %v1602 = vsel %vm588, %v1562, %v1563
    %v1603 = vsel %vm588, %v1561, %v1562
    %v1604 = vsel %vm588, %v1560, %v1561
    %v1605 = vsel %vm588, %v1559, %v1560
    %v1606 = vsel %vm588, %v1558, %v1559
    %v1607 = vsel %vm588, %v1557, %v1558
    %v1608 = vsel %vm588, %v1556, %v1557
    %v1609 = vsel %vm588, %v1555, %v1556
    %v1610 = vsel %vm588, %v1554, %v1555
    %v1611 = vsel %vm588, %v1553, %v1554
    %v1612 = vsel %vm588, %v1552, %v1553
    %v1613 = vsel %vm588, %v1551, %v1552
    %v1614 = vsel %vm588, %v1582, %v1551
    %v1615 = vadd.f32 %v1550, %v1613
    %v1616 = vadd.f32 %v1549, %v1612
    %v1617 = vadd.f32 %v1548, %v1611
    %v1618 = vadd.f32 %v1547, %v1610
    %v1619 = vadd.f32 %v1546, %v1609
    %v1620 = vadd.f32 %v1545, %v1608
    %v1621 = vadd.f32 %v1544, %v1607
    %v1622 = vadd.f32 %v1543, %v1606
    %v1623 = vadd.f32 %v1542, %v1605
    %v1624 = vadd.f32 %v1541, %v1604
    %v1625 = vadd.f32 %v1540, %v1603
    %v1626 = vadd.f32 %v1539, %v1602
    %v1627 = vadd.f32 %v1538, %v1601
    %v1628 = vadd.f32 %v1537, %v1600
    %v1629 = vadd.f32 %v1536, %v1599
    %v1630 = vadd.f32 %v1535, %v1598
    %v1631 = vadd.f32 %v1534, %v1597
    %v1632 = vadd.f32 %v1533, %v1596
    %v1633 = vadd.f32 %v1532, %v1595
    %v1634 = vadd.f32 %v1531, %v1594
    %v1635 = vadd.f32 %v1530, %v1593
    %v1636 = vadd.f32 %v1529, %v1592
    %v1637 = vadd.f32 %v1528, %v1591
    %v1638 = vadd.f32 %v1527, %v1590
    %v1639 = vadd.f32 %v1526, %v1589
    %v1640 = vadd.f32 %v1525, %v1588
    %v1641 = vadd.f32 %v1524, %v1587
    %v1642 = vadd.f32 %v1523, %v1586
    %v1643 = vadd.f32 %v1522, %v1585
    %v1644 = vadd.f32 %v1521, %v1584
    %v1645 = vadd.f32 %v1520, %v1583
    %v1646 = vadd.f32 %v1519, %v1614
    %v1647 = vadd.f32 %v1455, %v1615
    %v1648 = vadd.f32 %v1456, %v1616
    %v1649 = vadd.f32 %v1457, %v1617
    %v1650 = vadd.f32 %v1458, %v1618
    %v1651 = vadd.f32 %v1459, %v1619
    %v1652 = vadd.f32 %v1460, %v1620
    %v1653 = vadd.f32 %v1461, %v1621
    %v1654 = vadd.f32 %v1462, %v1622
    %v1655 = vadd.f32 %v1463, %v1623
    %v1656 = vadd.f32 %v1464, %v1624
    %v1657 = vadd.f32 %v1465, %v1625
    %v1658 = vadd.f32 %v1466, %v1626
    %v1659 = vadd.f32 %v1467, %v1627
    %v1660 = vadd.f32 %v1468, %v1628
    %v1661 = vadd.f32 %v1469, %v1629
    %v1662 = vadd.f32 %v1470, %v1630
    %v1663 = vadd.f32 %v1471, %v1631
    %v1664 = vadd.f32 %v1472, %v1632
    %v1665 = vadd.f32 %v1473, %v1633
    %v1666 = vadd.f32 %v1474, %v1634
    %v1667 = vadd.f32 %v1475, %v1635
    %v1668 = vadd.f32 %v1476, %v1636
    %v1669 = vadd.f32 %v1477, %v1637
    %v1670 = vadd.f32 %v1478, %v1638
    %v1671 = vadd.f32 %v1479, %v1639
    %v1672 = vadd.f32 %v1480, %v1640
    %v1673 = vadd.f32 %v1481, %v1641
    %v1674 = vadd.f32 %v1482, %v1642
    %v1675 = vadd.f32 %v1483, %v1643
    %v1676 = vadd.f32 %v1484, %v1644
    %v1677 = vadd.f32 %v1485, %v1645
    %v1678 = vadd.f32 %v1486, %v1646
    %v1679 = vmul.f32 %v172, %v1647
    %v1680 = vmul.f32 %v177, %v1648
    %v1681 = vmul.f32 %v182, %v1649
    %v1682 = vmul.f32 %v187, %v1650
    %v1683 = vmul.f32 %v192, %v1651
    %v1684 = vmul.f32 %v197, %v1652
    %v1685 = vmul.f32 %v202, %v1653
    %v1686 = vmul.f32 %v207, %v1654
    %v1687 = vmul.f32 %v212, %v1655
    %v1688 = vmul.f32 %v217, %v1656
    %v1689 = vmul.f32 %v222, %v1657
    %v1690 = vmul.f32 %v227, %v1658
    %v1691 = vmul.f32 %v232, %v1659
    %v1692 = vmul.f32 %v237, %v1660
    %v1693 = vmul.f32 %v242, %v1661
    %v1694 = vmul.f32 %v247, %v1662
    %v1695 = vmul.f32 %v252, %v1663
    %v1696 = vmul.f32 %v257, %v1664
    %v1697 = vmul.f32 %v262, %v1665
    %v1698 = vmul.f32 %v267, %v1666
    %v1699 = vmul.f32 %v272, %v1667
    %v1700 = vmul.f32 %v277, %v1668
    %v1701 = vmul.f32 %v282, %v1669
    %v1702 = vmul.f32 %v287, %v1670
    %v1703 = vmul.f32 %v292, %v1671
    %v1704 = vmul.f32 %v297, %v1672
    %v1705 = vmul.f32 %v302, %v1673
    %v1706 = vmul.f32 %v307, %v1674
    %v1707 = vmul.f32 %v312, %v1675
    %v1708 = vmul.f32 %v317, %v1676
    %v1709 = vmul.f32 %v322, %v1677
    %v1710 = vmul.f32 %v327, %v1678
    %v1711 = vpack.c.bf16 %v1680, %v1679
    %v1712 = vpack.c.bf16 %v1682, %v1681
    %v1713 = vpack.c.bf16 %v1684, %v1683
    %v1714 = vpack.c.bf16 %v1686, %v1685
    %v1715 = vpack.c.bf16 %v1688, %v1687
    %v1716 = vpack.c.bf16 %v1690, %v1689
    %v1717 = vpack.c.bf16 %v1692, %v1691
    %v1718 = vpack.c.bf16 %v1694, %v1693
    %v1719 = vpack.c.bf16 %v1696, %v1695
    %v1720 = vpack.c.bf16 %v1698, %v1697
    %v1721 = vpack.c.bf16 %v1700, %v1699
    %v1722 = vpack.c.bf16 %v1702, %v1701
    %v1723 = vpack.c.bf16 %v1704, %v1703
    %v1724 = vpack.c.bf16 %v1706, %v1705
    %v1725 = vpack.c.bf16 %v1708, %v1707
    %v1726 = vpack.c.bf16 %v1710, %v1709
    %v1743 = vunpack.c.l.b16 %v1423
    %v1744 = vunpack.c.l.b16 %v1424
    %v1745 = vunpack.c.l.b16 %v1425
    %v1746 = vunpack.c.l.b16 %v1426
    %v1747 = vunpack.c.l.b16 %v1427
    %v1748 = vunpack.c.l.b16 %v1428
    %v1749 = vunpack.c.l.b16 %v1429
    %v1750 = vunpack.c.l.b16 %v1430
    %v1751 = vunpack.c.l.b16 %v1431
    %v1752 = vunpack.c.l.b16 %v1432
    %v1753 = vunpack.c.l.b16 %v1433
    %v1754 = vunpack.c.l.b16 %v1434
    %v1755 = vunpack.c.l.b16 %v1435
    %v1756 = vunpack.c.l.b16 %v1436
    %v1757 = vunpack.c.l.b16 %v1437
    %v1758 = vunpack.c.l.b16 %v1438
    %v1759 = vpack.c.b16 %v1744, %v1743
    %v1760 = vpack.c.b16 %v1746, %v1745
    %v1761 = vpack.c.b16 %v1748, %v1747
    %v1762 = vpack.c.b16 %v1750, %v1749
    %v1763 = vpack.c.b16 %v1752, %v1751
    %v1764 = vpack.c.b16 %v1754, %v1753
    %v1765 = vpack.c.b16 %v1756, %v1755
    %v1766 = vpack.c.b16 %v1758, %v1757
    %1775 = vmatprep.subr.bf16.mxu0 0
    %1776 = vmatpush1.bf16.msra.mxu0 %v1759
    %1777 = vmatprep.subr.bf16.mxu0 0
    %1778 = vmatpush1.bf16.msra.mxu0 %v1760
    %1779 = vmatprep.subr.bf16.mxu0 0
    %1780 = vmatpush1.bf16.msra.mxu0 %v1761
    %1781 = vmatprep.subr.bf16.mxu0 0
    %1782 = vmatpush1.bf16.msra.mxu0 %v1762
    %1783 = vmatprep.subr.bf16.mxu0 0
    %1784 = vmatpush1.bf16.msra.mxu0 %v1763
    %1785 = vmatprep.subr.bf16.mxu0 0
    %1786 = vmatpush1.bf16.msra.mxu0 %v1764
    %1787 = vmatprep.subr.bf16.mxu0 0
    %1788 = vmatpush1.bf16.msra.mxu0 %v1765
    %1789 = vmatprep.subr.bf16.mxu0 0
    %1790 = vmatpush1.bf16.msra.mxu0 %v1766
    %1791 = vmatprep.subr.bf16.mxu0 0
    %1792 = vmatpush1.bf16.msra.mxu0 0
    %1793 = vmatprep.subr.bf16.mxu0 0
    %1794 = vmatpush1.bf16.msra.mxu0 0
    %1795 = vmatprep.subr.bf16.mxu0 0
    %1796 = vmatpush1.bf16.msra.mxu0 0
    %1797 = vmatprep.subr.bf16.mxu0 0
    %1798 = vmatpush1.bf16.msra.mxu0 0
    %1799 = vmatprep.subr.bf16.mxu0 0
    %1800 = vmatpush1.bf16.msra.mxu0 0
    %1801 = vmatprep.subr.bf16.mxu0 0
    %1802 = vmatpush1.bf16.msra.mxu0 0
    %1803 = vmatprep.subr.bf16.mxu0 0
    %1804 = vmatpush1.bf16.msra.mxu0 0
    %1805 = vmatprep.subr.bf16.mxu0 0
    %1806 = vmatpush1.bf16.msra.mxu0 0
    %1807 = vmatprep.mubr.bf16.mxu0 0
    %1808 = vmatmul.mubr.bf16.gmra.mrb[0].mxu0 %v1711
    %v1809 = vpop.f32.mrb[0].mxu0
    %v1810 = vadd.f32 0.0, %v1809
    %v1811 = vpop.f32.mrb[0].mxu0
    %v1812 = vpop.f32.mrb[0].mxu0
    %v1813 = vadd.f32 0.0, %v1812
    %v1814 = vpop.f32.mrb[0].mxu0
    %1815 = vmatprep.mubr.bf16.mxu0 0
    %1816 = vmatmul.mubr.bf16.gmra.mrb[0].mxu0 %v1712
    %v1817 = vpop.f32.mrb[0].mxu0
    %v1818 = vadd.f32 0.0, %v1817
    %v1819 = vpop.f32.mrb[0].mxu0
    %v1820 = vpop.f32.mrb[0].mxu0
    %v1821 = vadd.f32 0.0, %v1820
    %v1822 = vpop.f32.mrb[0].mxu0
    %1823 = vmatprep.mubr.bf16.mxu0 0
    %1824 = vmatmul.mubr.bf16.gmra.mrb[0].mxu0 %v1713
    %v1825 = vpop.f32.mrb[0].mxu0
    %v1826 = vadd.f32 0.0, %v1825
    %v1827 = vpop.f32.mrb[0].mxu0
    %v1828 = vpop.f32.mrb[0].mxu0
    %v1829 = vadd.f32 0.0, %v1828
    %v1830 = vpop.f32.mrb[0].mxu0
    %1831 = vmatprep.mubr.bf16.mxu0 0
    %1832 = vmatmul.mubr.bf16.gmra.mrb[0].mxu0 %v1714
    %v1833 = vpop.f32.mrb[0].mxu0
    %v1834 = vadd.f32 0.0, %v1833
    %v1835 = vpop.f32.mrb[0].mxu0
    %v1836 = vpop.f32.mrb[0].mxu0
    %v1837 = vadd.f32 0.0, %v1836
    %v1838 = vpop.f32.mrb[0].mxu0
    %1839 = vmatprep.mubr.bf16.mxu0 0
    %1840 = vmatmul.mubr.bf16.gmra.mrb[0].mxu0 %v1715
    %v1841 = vpop.f32.mrb[0].mxu0
    %v1842 = vadd.f32 0.0, %v1841
    %v1843 = vpop.f32.mrb[0].mxu0
    %v1844 = vpop.f32.mrb[0].mxu0
    %v1845 = vadd.f32 0.0, %v1844
    %v1846 = vpop.f32.mrb[0].mxu0
    %1847 = vmatprep.mubr.bf16.mxu0 0
    %1848 = vmatmul.mubr.bf16.gmra.mrb[0].mxu0 %v1716
    %v1849 = vpop.f32.mrb[0].mxu0
    %v1850 = vadd.f32 0.0, %v1849
    %v1851 = vpop.f32.mrb[0].mxu0
    %v1852 = vpop.f32.mrb[0].mxu0
    %v1853 = vadd.f32 0.0, %v1852
    %v1854 = vpop.f32.mrb[0].mxu0
    %1855 = vmatprep.mubr.bf16.mxu0 0
    %1856 = vmatmul.mubr.bf16.gmra.mrb[0].mxu0 %v1717
    %v1857 = vpop.f32.mrb[0].mxu0
    %v1858 = vadd.f32 0.0, %v1857
    %v1859 = vpop.f32.mrb[0].mxu0
    %v1860 = vpop.f32.mrb[0].mxu0
    %v1861 = vadd.f32 0.0, %v1860
    %v1862 = vpop.f32.mrb[0].mxu0
    %1863 = vmatprep.mubr.bf16.mxu0 0
    %1864 = vmatmul.mubr.bf16.gmra.mrb[0].mxu0 %v1718
    %v1865 = vpop.f32.mrb[0].mxu0
    %v1866 = vadd.f32 0.0, %v1865
    %v1867 = vpop.f32.mrb[0].mxu0
    %v1868 = vpop.f32.mrb[0].mxu0
    %v1869 = vadd.f32 0.0, %v1868
    %v1870 = vpop.f32.mrb[0].mxu0
    %1871 = vmatprep.mubr.bf16.mxu0 0
    %1872 = vmatmul.mubr.bf16.gmra.mrb[0].mxu0 %v1719
    %v1873 = vpop.f32.mrb[0].mxu0
    %v1874 = vadd.f32 0.0, %v1873
    %v1875 = vpop.f32.mrb[0].mxu0
    %v1876 = vpop.f32.mrb[0].mxu0
    %v1877 = vadd.f32 0.0, %v1876
    %v1878 = vpop.f32.mrb[0].mxu0
    %1879 = vmatprep.mubr.bf16.mxu0 0
    %1880 = vmatmul.mubr.bf16.gmra.mrb[0].mxu0 %v1720
    %v1881 = vpop.f32.mrb[0].mxu0
    %v1882 = vadd.f32 0.0, %v1881
    %v1883 = vpop.f32.mrb[0].mxu0
    %v1884 = vpop.f32.mrb[0].mxu0
    %v1885 = vadd.f32 0.0, %v1884
    %v1886 = vpop.f32.mrb[0].mxu0
    %1887 = vmatprep.mubr.bf16.mxu0 0
    %1888 = vmatmul.mubr.bf16.gmra.mrb[0].mxu0 %v1721
    %v1889 = vpop.f32.mrb[0].mxu0
    %v1890 = vadd.f32 0.0, %v1889
    %v1891 = vpop.f32.mrb[0].mxu0
    %v1892 = vpop.f32.mrb[0].mxu0
    %v1893 = vadd.f32 0.0, %v1892
    %v1894 = vpop.f32.mrb[0].mxu0
    %1895 = vmatprep.mubr.bf16.mxu0 0
    %1896 = vmatmul.mubr.bf16.gmra.mrb[0].mxu0 %v1722
    %v1897 = vpop.f32.mrb[0].mxu0
    %v1898 = vadd.f32 0.0, %v1897
    %v1899 = vpop.f32.mrb[0].mxu0
    %v1900 = vpop.f32.mrb[0].mxu0
    %v1901 = vadd.f32 0.0, %v1900
    %v1902 = vpop.f32.mrb[0].mxu0
    %1903 = vmatprep.mubr.bf16.mxu0 0
    %1904 = vmatmul.mubr.bf16.gmra.mrb[0].mxu0 %v1723
    %v1905 = vpop.f32.mrb[0].mxu0
    %v1906 = vadd.f32 0.0, %v1905
    %v1907 = vpop.f32.mrb[0].mxu0
    %v1908 = vpop.f32.mrb[0].mxu0
    %v1909 = vadd.f32 0.0, %v1908
    %v1910 = vpop.f32.mrb[0].mxu0
    %1911 = vmatprep.mubr.bf16.mxu0 0
    %1912 = vmatmul.mubr.bf16.gmra.mrb[0].mxu0 %v1724
    %v1913 = vpop.f32.mrb[0].mxu0
    %v1914 = vadd.f32 0.0, %v1913
    %v1915 = vpop.f32.mrb[0].mxu0
    %v1916 = vpop.f32.mrb[0].mxu0
    %v1917 = vadd.f32 0.0, %v1916
    %v1918 = vpop.f32.mrb[0].mxu0
    %1919 = vmatprep.mubr.bf16.mxu0 0
    %1920 = vmatmul.mubr.bf16.gmra.mrb[0].mxu0 %v1725
    %v1921 = vpop.f32.mrb[0].mxu0
    %v1922 = vadd.f32 0.0, %v1921
    %v1923 = vpop.f32.mrb[0].mxu0
    %v1924 = vpop.f32.mrb[0].mxu0
    %v1925 = vadd.f32 0.0, %v1924
    %v1926 = vpop.f32.mrb[0].mxu0
    %1927 = vmatprep.mubr.bf16.mxu0 0
    %1928 = vmatmul.mubr.bf16.gmra.mrb[0].mxu0 %v1726
    %v1929 = vpop.f32.mrb[0].mxu0
    %v1930 = vadd.f32 0.0, %v1929
    %v1931 = vpop.f32.mrb[0].mxu0
    %v1932 = vpop.f32.mrb[0].mxu0
    %v1933 = vadd.f32 0.0, %v1932
    %v1934 = vpop.f32.mrb[0].mxu0
    %1935 = vdwg.mxu0
    %v1936 = vmax.f32 %v1810, 0.0
    %v1937 = vmax.f32 %v1813, 0.0
    %v1938 = vmax.f32 %v1818, 0.0
    %v1939 = vmax.f32 %v1821, 0.0
    %v1940 = vmax.f32 %v1826, 0.0
    %v1941 = vmax.f32 %v1829, 0.0
    %v1942 = vmax.f32 %v1834, 0.0
    %v1943 = vmax.f32 %v1837, 0.0
    %v1944 = vmax.f32 %v1842, 0.0
    %v1945 = vmax.f32 %v1845, 0.0
    %v1946 = vmax.f32 %v1850, 0.0
    %v1947 = vmax.f32 %v1853, 0.0
    %v1948 = vmax.f32 %v1858, 0.0
    %v1949 = vmax.f32 %v1861, 0.0
    %v1950 = vmax.f32 %v1866, 0.0
    %v1951 = vmax.f32 %v1869, 0.0
    %v1952 = vmax.f32 %v1874, 0.0
    %v1953 = vmax.f32 %v1877, 0.0
    %v1954 = vmax.f32 %v1882, 0.0
    %v1955 = vmax.f32 %v1885, 0.0
    %v1956 = vmax.f32 %v1890, 0.0
    %v1957 = vmax.f32 %v1893, 0.0
    %v1958 = vmax.f32 %v1898, 0.0
    %v1959 = vmax.f32 %v1901, 0.0
    %v1960 = vmax.f32 %v1906, 0.0
    %v1961 = vmax.f32 %v1909, 0.0
    %v1962 = vmax.f32 %v1914, 0.0
    %v1963 = vmax.f32 %v1917, 0.0
    %v1964 = vmax.f32 %v1922, 0.0
    %v1965 = vmax.f32 %v1925, 0.0
    %v1966 = vmax.f32 %v1930, 0.0
    %v1967 = vmax.f32 %v1933, 0.0
    %v1968 = vpack.c.bf16 %v1937, %v1936
    %v1969 = vpack.c.bf16 %v1939, %v1938
    %v1970 = vpack.c.bf16 %v1941, %v1940
    %v1971 = vpack.c.bf16 %v1943, %v1942
    %v1972 = vpack.c.bf16 %v1945, %v1944
    %v1973 = vpack.c.bf16 %v1947, %v1946
    %v1974 = vpack.c.bf16 %v1949, %v1948
    %v1975 = vpack.c.bf16 %v1951, %v1950
    %v1976 = vpack.c.bf16 %v1953, %v1952
    %v1977 = vpack.c.bf16 %v1955, %v1954
    %v1978 = vpack.c.bf16 %v1957, %v1956
    %v1979 = vpack.c.bf16 %v1959, %v1958
    %v1980 = vpack.c.bf16 %v1961, %v1960
    %v1981 = vpack.c.bf16 %v1963, %v1962
    %v1982 = vpack.c.bf16 %v1965, %v1964
    %v1983 = vpack.c.bf16 %v1967, %v1966
    %v2000 = vunpack.c.l.b16 %v1439
    %v2001 = vunpack.c.l.b16 %v1440
    %v2002 = vunpack.c.l.b16 %v1441
    %v2003 = vunpack.c.l.b16 %v1442
    %v2004 = vunpack.c.l.b16 %v1443
    %v2005 = vunpack.c.l.b16 %v1444
    %v2006 = vunpack.c.l.b16 %v1445
    %v2007 = vunpack.c.l.b16 %v1446
    %v2008 = vunpack.c.l.b16 %v1447
    %v2009 = vunpack.c.l.b16 %v1448
    %v2010 = vunpack.c.l.b16 %v1449
    %v2011 = vunpack.c.l.b16 %v1450
    %v2012 = vunpack.c.l.b16 %v1451
    %v2013 = vunpack.c.l.b16 %v1452
    %v2014 = vunpack.c.l.b16 %v1453
    %v2015 = vunpack.c.l.b16 %v1454
    %v2016 = vpack.c.b16 %v2001, %v2000
    %v2017 = vpack.c.b16 %v2003, %v2002
    %v2018 = vpack.c.b16 %v2005, %v2004
    %v2019 = vpack.c.b16 %v2007, %v2006
    %v2020 = vpack.c.b16 %v2009, %v2008
    %v2021 = vpack.c.b16 %v2011, %v2010
    %v2022 = vpack.c.b16 %v2013, %v2012
    %v2023 = vpack.c.b16 %v2015, %v2014
    %2032 = vmatprep.subr.bf16.mxu0 0
    %2033 = vmatpush1.bf16.msra.mxu0 %v2016
    %2034 = vmatprep.subr.bf16.mxu0 0
    %2035 = vmatpush1.bf16.msra.mxu0 %v2017
    %2036 = vmatprep.subr.bf16.mxu0 0
    %2037 = vmatpush1.bf16.msra.mxu0 %v2018
    %2038 = vmatprep.subr.bf16.mxu0 0
    %2039 = vmatpush1.bf16.msra.mxu0 %v2019
    %2040 = vmatprep.subr.bf16.mxu0 0
    %2041 = vmatpush1.bf16.msra.mxu0 %v2020
    %2042 = vmatprep.subr.bf16.mxu0 0
    %2043 = vmatpush1.bf16.msra.mxu0 %v2021
    %2044 = vmatprep.subr.bf16.mxu0 0
    %2045 = vmatpush1.bf16.msra.mxu0 %v2022
    %2046 = vmatprep.subr.bf16.mxu0 0
    %2047 = vmatpush1.bf16.msra.mxu0 %v2023
    %2048 = vmatprep.subr.bf16.mxu0 0
    %2049 = vmatpush1.bf16.msra.mxu0 0
    %2050 = vmatprep.subr.bf16.mxu0 0
    %2051 = vmatpush1.bf16.msra.mxu0 0
    %2052 = vmatprep.subr.bf16.mxu0 0
    %2053 = vmatpush1.bf16.msra.mxu0 0
    %2054 = vmatprep.subr.bf16.mxu0 0
    %2055 = vmatpush1.bf16.msra.mxu0 0
    %2056 = vmatprep.subr.bf16.mxu0 0
    %2057 = vmatpush1.bf16.msra.mxu0 0
    %2058 = vmatprep.subr.bf16.mxu0 0
    %2059 = vmatpush1.bf16.msra.mxu0 0
    %2060 = vmatprep.subr.bf16.mxu0 0
    %2061 = vmatpush1.bf16.msra.mxu0 0
    %2062 = vmatprep.subr.bf16.mxu0 0
    %2063 = vmatpush1.bf16.msra.mxu0 0
    %2064 = vmatprep.mubr.bf16.mxu0 0
    %2065 = vmatmul.mubr.bf16.gmra.mrb[0].mxu0 %v1968
    %v2066 = vpop.f32.mrb[0].mxu0
    %v2067 = vadd.f32 0.0, %v2066
    %v2068 = vpop.f32.mrb[0].mxu0
    %v2069 = vpop.f32.mrb[0].mxu0
    %v2070 = vadd.f32 0.0, %v2069
    %v2071 = vpop.f32.mrb[0].mxu0
    %2072 = vmatprep.mubr.bf16.mxu0 0
    %2073 = vmatmul.mubr.bf16.gmra.mrb[0].mxu0 %v1969
    %v2074 = vpop.f32.mrb[0].mxu0
    %v2075 = vadd.f32 0.0, %v2074
    %v2076 = vpop.f32.mrb[0].mxu0
    %v2077 = vpop.f32.mrb[0].mxu0
    %v2078 = vadd.f32 0.0, %v2077
    %v2079 = vpop.f32.mrb[0].mxu0
    %2080 = vmatprep.mubr.bf16.mxu0 0
    %2081 = vmatmul.mubr.bf16.gmra.mrb[0].mxu0 %v1970
    %v2082 = vpop.f32.mrb[0].mxu0
    %v2083 = vadd.f32 0.0, %v2082
    %v2084 = vpop.f32.mrb[0].mxu0
    %v2085 = vpop.f32.mrb[0].mxu0
    %v2086 = vadd.f32 0.0, %v2085
    %v2087 = vpop.f32.mrb[0].mxu0
    %2088 = vmatprep.mubr.bf16.mxu0 0
    %2089 = vmatmul.mubr.bf16.gmra.mrb[0].mxu0 %v1971
    %v2090 = vpop.f32.mrb[0].mxu0
    %v2091 = vadd.f32 0.0, %v2090
    %v2092 = vpop.f32.mrb[0].mxu0
    %v2093 = vpop.f32.mrb[0].mxu0
    %v2094 = vadd.f32 0.0, %v2093
    %v2095 = vpop.f32.mrb[0].mxu0
    %2096 = vmatprep.mubr.bf16.mxu0 0
    %2097 = vmatmul.mubr.bf16.gmra.mrb[0].mxu0 %v1972
    %v2098 = vpop.f32.mrb[0].mxu0
    %v2099 = vadd.f32 0.0, %v2098
    %v2100 = vpop.f32.mrb[0].mxu0
    %v2101 = vpop.f32.mrb[0].mxu0
    %v2102 = vadd.f32 0.0, %v2101
    %v2103 = vpop.f32.mrb[0].mxu0
    %2104 = vmatprep.mubr.bf16.mxu0 0
    %2105 = vmatmul.mubr.bf16.gmra.mrb[0].mxu0 %v1973
    %v2106 = vpop.f32.mrb[0].mxu0
    %v2107 = vadd.f32 0.0, %v2106
    %v2108 = vpop.f32.mrb[0].mxu0
    %v2109 = vpop.f32.mrb[0].mxu0
    %v2110 = vadd.f32 0.0, %v2109
    %v2111 = vpop.f32.mrb[0].mxu0
    %2112 = vmatprep.mubr.bf16.mxu0 0
    %2113 = vmatmul.mubr.bf16.gmra.mrb[0].mxu0 %v1974
    %v2114 = vpop.f32.mrb[0].mxu0
    %v2115 = vadd.f32 0.0, %v2114
    %v2116 = vpop.f32.mrb[0].mxu0
    %v2117 = vpop.f32.mrb[0].mxu0
    %v2118 = vadd.f32 0.0, %v2117
    %v2119 = vpop.f32.mrb[0].mxu0
    %2120 = vmatprep.mubr.bf16.mxu0 0
    %2121 = vmatmul.mubr.bf16.gmra.mrb[0].mxu0 %v1975
    %v2122 = vpop.f32.mrb[0].mxu0
    %v2123 = vadd.f32 0.0, %v2122
    %v2124 = vpop.f32.mrb[0].mxu0
    %v2125 = vpop.f32.mrb[0].mxu0
    %v2126 = vadd.f32 0.0, %v2125
    %v2127 = vpop.f32.mrb[0].mxu0
    %2128 = vmatprep.mubr.bf16.mxu0 0
    %2129 = vmatmul.mubr.bf16.gmra.mrb[0].mxu0 %v1976
    %v2130 = vpop.f32.mrb[0].mxu0
    %v2131 = vadd.f32 0.0, %v2130
    %v2132 = vpop.f32.mrb[0].mxu0
    %v2133 = vpop.f32.mrb[0].mxu0
    %v2134 = vadd.f32 0.0, %v2133
    %v2135 = vpop.f32.mrb[0].mxu0
    %2136 = vmatprep.mubr.bf16.mxu0 0
    %2137 = vmatmul.mubr.bf16.gmra.mrb[0].mxu0 %v1977
    %v2138 = vpop.f32.mrb[0].mxu0
    %v2139 = vadd.f32 0.0, %v2138
    %v2140 = vpop.f32.mrb[0].mxu0
    %v2141 = vpop.f32.mrb[0].mxu0
    %v2142 = vadd.f32 0.0, %v2141
    %v2143 = vpop.f32.mrb[0].mxu0
    %2144 = vmatprep.mubr.bf16.mxu0 0
    %2145 = vmatmul.mubr.bf16.gmra.mrb[0].mxu0 %v1978
    %v2146 = vpop.f32.mrb[0].mxu0
    %v2147 = vadd.f32 0.0, %v2146
    %v2148 = vpop.f32.mrb[0].mxu0
    %v2149 = vpop.f32.mrb[0].mxu0
    %v2150 = vadd.f32 0.0, %v2149
    %v2151 = vpop.f32.mrb[0].mxu0
    %2152 = vmatprep.mubr.bf16.mxu0 0
    %2153 = vmatmul.mubr.bf16.gmra.mrb[0].mxu0 %v1979
    %v2154 = vpop.f32.mrb[0].mxu0
    %v2155 = vadd.f32 0.0, %v2154
    %v2156 = vpop.f32.mrb[0].mxu0
    %v2157 = vpop.f32.mrb[0].mxu0
    %v2158 = vadd.f32 0.0, %v2157
    %v2159 = vpop.f32.mrb[0].mxu0
    %2160 = vmatprep.mubr.bf16.mxu0 0
    %2161 = vmatmul.mubr.bf16.gmra.mrb[0].mxu0 %v1980
    %v2162 = vpop.f32.mrb[0].mxu0
    %v2163 = vadd.f32 0.0, %v2162
    %v2164 = vpop.f32.mrb[0].mxu0
    %v2165 = vpop.f32.mrb[0].mxu0
    %v2166 = vadd.f32 0.0, %v2165
    %v2167 = vpop.f32.mrb[0].mxu0
    %2168 = vmatprep.mubr.bf16.mxu0 0
    %2169 = vmatmul.mubr.bf16.gmra.mrb[0].mxu0 %v1981
    %v2170 = vpop.f32.mrb[0].mxu0
    %v2171 = vadd.f32 0.0, %v2170
    %v2172 = vpop.f32.mrb[0].mxu0
    %v2173 = vpop.f32.mrb[0].mxu0
    %v2174 = vadd.f32 0.0, %v2173
    %v2175 = vpop.f32.mrb[0].mxu0
    %2176 = vmatprep.mubr.bf16.mxu0 0
    %2177 = vmatmul.mubr.bf16.gmra.mrb[0].mxu0 %v1982
    %v2178 = vpop.f32.mrb[0].mxu0
    %v2179 = vadd.f32 0.0, %v2178
    %v2180 = vpop.f32.mrb[0].mxu0
    %v2181 = vpop.f32.mrb[0].mxu0
    %v2182 = vadd.f32 0.0, %v2181
    %v2183 = vpop.f32.mrb[0].mxu0
    %2184 = vmatprep.mubr.bf16.mxu0 0
    %2185 = vmatmul.mubr.bf16.gmra.mrb[0].mxu0 %v1983
    %v2186 = vpop.f32.mrb[0].mxu0
    %v2187 = vadd.f32 0.0, %v2186
    %v2188 = vpop.f32.mrb[0].mxu0
    %v2189 = vpop.f32.mrb[0].mxu0
    %v2190 = vadd.f32 0.0, %v2189
    %v2191 = vpop.f32.mrb[0].mxu0
    %2192 = vdwg.mxu0
    %v2193 = vmax.f32 %v2067, %v2131
    %v2194 = vmax.f32 %v2070, %v2134
    %v2195 = vmax.f32 %v2075, %v2139
    %v2196 = vmax.f32 %v2078, %v2142
    %v2197 = vmax.f32 %v2083, %v2147
    %v2198 = vmax.f32 %v2086, %v2150
    %v2199 = vmax.f32 %v2091, %v2155
    %v2200 = vmax.f32 %v2094, %v2158
    %v2201 = vmax.f32 %v2099, %v2163
    %v2202 = vmax.f32 %v2102, %v2166
    %v2203 = vmax.f32 %v2107, %v2171
    %v2204 = vmax.f32 %v2110, %v2174
    %v2205 = vmax.f32 %v2115, %v2179
    %v2206 = vmax.f32 %v2118, %v2182
    %v2207 = vmax.f32 %v2123, %v2187
    %v2208 = vmax.f32 %v2126, %v2190
    %v2209 = vsub.f32 %v2067, %v2193
    %v2210 = vsub.f32 %v2070, %v2194
    %v2211 = vsub.f32 %v2075, %v2195
    %v2212 = vsub.f32 %v2078, %v2196
    %v2213 = vsub.f32 %v2083, %v2197
    %v2214 = vsub.f32 %v2086, %v2198
    %v2215 = vsub.f32 %v2091, %v2199
    %v2216 = vsub.f32 %v2094, %v2200
    %v2217 = vsub.f32 %v2099, %v2201
    %v2218 = vsub.f32 %v2102, %v2202
    %v2219 = vsub.f32 %v2107, %v2203
    %v2220 = vsub.f32 %v2110, %v2204
    %v2221 = vsub.f32 %v2115, %v2205
    %v2222 = vsub.f32 %v2118, %v2206
    %v2223 = vsub.f32 %v2123, %v2207
    %v2224 = vsub.f32 %v2126, %v2208
    %v2225 = vmul.f32 %v2209, 1.442695
    %v2226 = vpow.pop %v2225
    %v2227 = vmul.f32 %v2210, 1.442695
    %v2228 = vpow.pop %v2227
    %v2229 = vmul.f32 %v2211, 1.442695
    %v2230 = vpow.pop %v2229
    %v2231 = vmul.f32 %v2212, 1.442695
    %v2232 = vpow.pop %v2231
    %v2233 = vmul.f32 %v2213, 1.442695
    %v2234 = vpow.pop %v2233
    %v2235 = vmul.f32 %v2214, 1.442695
    %v2236 = vpow.pop %v2235
    %v2237 = vmul.f32 %v2215, 1.442695
    %v2238 = vpow.pop %v2237
    %v2239 = vmul.f32 %v2216, 1.442695
    %v2240 = vpow.pop %v2239
    %v2241 = vmul.f32 %v2217, 1.442695
    %v2242 = vpow.pop %v2241
    %v2243 = vmul.f32 %v2218, 1.442695
    %v2244 = vpow.pop %v2243
    %v2245 = vmul.f32 %v2219, 1.442695
    %v2246 = vpow.pop %v2245
    %v2247 = vmul.f32 %v2220, 1.442695
    %v2248 = vpow.pop %v2247
    %v2249 = vmul.f32 %v2221, 1.442695
    %v2250 = vpow.pop %v2249
    %v2251 = vmul.f32 %v2222, 1.442695
    %v2252 = vpow.pop %v2251
    %v2253 = vmul.f32 %v2223, 1.442695
    %v2254 = vpow.pop %v2253
    %v2255 = vmul.f32 %v2224, 1.442695
    %v2256 = vpow.pop %v2255
    %v2257 = vsub.f32 %v2131, %v2193
    %v2258 = vsub.f32 %v2134, %v2194
    %v2259 = vsub.f32 %v2139, %v2195
    %v2260 = vsub.f32 %v2142, %v2196
    %v2261 = vsub.f32 %v2147, %v2197
    %v2262 = vsub.f32 %v2150, %v2198
    %v2263 = vsub.f32 %v2155, %v2199
    %v2264 = vsub.f32 %v2158, %v2200
    %v2265 = vsub.f32 %v2163, %v2201
    %v2266 = vsub.f32 %v2166, %v2202
    %v2267 = vsub.f32 %v2171, %v2203
    %v2268 = vsub.f32 %v2174, %v2204
    %v2269 = vsub.f32 %v2179, %v2205
    %v2270 = vsub.f32 %v2182, %v2206
    %v2271 = vsub.f32 %v2187, %v2207
    %v2272 = vsub.f32 %v2190, %v2208
    %v2273 = vmul.f32 %v2257, 1.442695
    %v2274 = vpow.pop %v2273
    %v2275 = vmul.f32 %v2258, 1.442695
    %v2276 = vpow.pop %v2275
    %v2277 = vmul.f32 %v2259, 1.442695
    %v2278 = vpow.pop %v2277
    %v2279 = vmul.f32 %v2260, 1.442695
    %v2280 = vpow.pop %v2279
    %v2281 = vmul.f32 %v2261, 1.442695
    %v2282 = vpow.pop %v2281
    %v2283 = vmul.f32 %v2262, 1.442695
    %v2284 = vpow.pop %v2283
    %v2285 = vmul.f32 %v2263, 1.442695
    %v2286 = vpow.pop %v2285
    %v2287 = vmul.f32 %v2264, 1.442695
    %v2288 = vpow.pop %v2287
    %v2289 = vmul.f32 %v2265, 1.442695
    %v2290 = vpow.pop %v2289
    %v2291 = vmul.f32 %v2266, 1.442695
    %v2292 = vpow.pop %v2291
    %v2293 = vmul.f32 %v2267, 1.442695
    %v2294 = vpow.pop %v2293
    %v2295 = vmul.f32 %v2268, 1.442695
    %v2296 = vpow.pop %v2295
    %v2297 = vmul.f32 %v2269, 1.442695
    %v2298 = vpow.pop %v2297
    %v2299 = vmul.f32 %v2270, 1.442695
    %v2300 = vpow.pop %v2299
    %v2301 = vmul.f32 %v2271, 1.442695
    %v2302 = vpow.pop %v2301
    %v2303 = vmul.f32 %v2272, 1.442695
    %v2304 = vpow.pop %v2303
    %v2305 = vadd.f32 %v2226, %v2274
    %v2306 = vadd.f32 %v2228, %v2276
    %v2307 = vadd.f32 %v2230, %v2278
    %v2308 = vadd.f32 %v2232, %v2280
    %v2309 = vadd.f32 %v2234, %v2282
    %v2310 = vadd.f32 %v2236, %v2284
    %v2311 = vadd.f32 %v2238, %v2286
    %v2312 = vadd.f32 %v2240, %v2288
    %v2313 = vadd.f32 %v2242, %v2290
    %v2314 = vadd.f32 %v2244, %v2292
    %v2315 = vadd.f32 %v2246, %v2294
    %v2316 = vadd.f32 %v2248, %v2296
    %v2317 = vadd.f32 %v2250, %v2298
    %v2318 = vadd.f32 %v2252, %v2300
    %v2319 = vadd.f32 %v2254, %v2302
    %v2320 = vadd.f32 %v2256, %v2304
    %v2321 = vadd.s32 %v458, 8
    %v2322 = vadd.s32 %v458, 16
    %v2323 = vadd.s32 %v458, 24
    %v2324 = vadd.s32 %v458, 32
    %v2325 = vadd.s32 %v458, 40
    %v2326 = vadd.s32 %v458, 48
    %v2327 = vadd.s32 %v458, 56
    %v2328 = vadd.s32 %v458, 64
    %v2329 = vadd.s32 %v458, 72
    %v2330 = vadd.s32 %v458, 80
    %v2331 = vadd.s32 %v458, 88
    %v2332 = vadd.s32 %v458, 96
    %v2333 = vadd.s32 %v458, 104
    %v2334 = vadd.s32 %v458, 112
    %v2335 = vadd.s32 %v458, 120
    %vm2336 = vcmp.lt.s32.totalorder %v458, 90
    %vm2337 = vcmp.lt.s32.totalorder %v2321, 90
    %vm2338 = vcmp.lt.s32.totalorder %v2322, 90
    %vm2339 = vcmp.lt.s32.totalorder %v2323, 90
    %vm2340 = vcmp.lt.s32.totalorder %v2324, 90
    %vm2341 = vcmp.lt.s32.totalorder %v2325, 90
    %vm2342 = vcmp.lt.s32.totalorder %v2326, 90
    %vm2343 = vcmp.lt.s32.totalorder %v2327, 90
    %vm2344 = vcmp.lt.s32.totalorder %v2328, 90
    %vm2345 = vcmp.lt.s32.totalorder %v2329, 90
    %vm2346 = vcmp.lt.s32.totalorder %v2330, 90
    %vm2347 = vcmp.lt.s32.totalorder %v2331, 90
    %vm2348 = vcmp.lt.s32.totalorder %v2332, 90
    %vm2349 = vcmp.lt.s32.totalorder %v2333, 90
    %vm2350 = vcmp.lt.s32.totalorder %v2334, 90
    %vm2351 = vcmp.lt.s32.totalorder %v2335, 90
    %v2352 = vsel %vm2336, 1, 0
    %v2353 = vsel %vm2337, 1, 0
    %v2354 = vsel %vm2338, 1, 0
    %v2355 = vsel %vm2339, 1, 0
    %v2356 = vsel %vm2340, 1, 0
    %v2357 = vsel %vm2341, 1, 0
    %v2358 = vsel %vm2342, 1, 0
    %v2359 = vsel %vm2343, 1, 0
    %v2360 = vsel %vm2344, 1, 0
    %v2361 = vsel %vm2345, 1, 0
    %v2362 = vsel %vm2346, 1, 0
    %v2363 = vsel %vm2347, 1, 0
    %v2364 = vsel %vm2348, 1, 0
    %v2365 = vsel %vm2349, 1, 0
    %v2366 = vsel %vm2350, 1, 0
    %v2367 = vsel %vm2351, 1, 0
    %v2368 = vcvt.s32.f32 %v2352
    %v2369 = vcvt.s32.f32 %v2353
    %v2370 = vcvt.s32.f32 %v2354
    %v2371 = vcvt.s32.f32 %v2355
    %v2372 = vcvt.s32.f32 %v2356
    %v2373 = vcvt.s32.f32 %v2357
    %v2374 = vcvt.s32.f32 %v2358
    %v2375 = vcvt.s32.f32 %v2359
    %v2376 = vcvt.s32.f32 %v2360
    %v2377 = vcvt.s32.f32 %v2361
    %v2378 = vcvt.s32.f32 %v2362
    %v2379 = vcvt.s32.f32 %v2363
    %v2380 = vcvt.s32.f32 %v2364
    %v2381 = vcvt.s32.f32 %v2365
    %v2382 = vcvt.s32.f32 %v2366
    %v2383 = vcvt.s32.f32 %v2367
    %v2384 = vrcp.pop %v2305
    %v2385 = vrcp.pop %v2306
    %v2386 = vrcp.pop %v2307
    %v2387 = vrcp.pop %v2308
    %v2388 = vrcp.pop %v2309
    %v2389 = vrcp.pop %v2310
    %v2390 = vrcp.pop %v2311
    %v2391 = vrcp.pop %v2312
    %v2392 = vrcp.pop %v2313
    %v2393 = vrcp.pop %v2314
    %v2394 = vrcp.pop %v2315
    %v2395 = vrcp.pop %v2316
    %v2396 = vrcp.pop %v2317
    %v2397 = vrcp.pop %v2318
    %v2398 = vrcp.pop %v2319
    %v2399 = vrcp.pop %v2320
    %v2400 = vmul.f32 %v2384, %v2368
    %v2401 = vmul.f32 %v2385, %v2369
    %v2402 = vmul.f32 %v2386, %v2370
    %v2403 = vmul.f32 %v2387, %v2371
    %v2404 = vmul.f32 %v2388, %v2372
    %v2405 = vmul.f32 %v2389, %v2373
    %v2406 = vmul.f32 %v2390, %v2374
    %v2407 = vmul.f32 %v2391, %v2375
    %v2408 = vmul.f32 %v2392, %v2376
    %v2409 = vmul.f32 %v2393, %v2377
    %v2410 = vmul.f32 %v2394, %v2378
    %v2411 = vmul.f32 %v2395, %v2379
    %v2412 = vmul.f32 %v2396, %v2380
    %v2413 = vmul.f32 %v2397, %v2381
    %v2414 = vmul.f32 %v2398, %v2382
    %v2415 = vmul.f32 %v2399, %v2383
    %v2416 = vmul.f32 %v2226, %v2400
    %v2417 = vmul.f32 %v2228, %v2401
    %v2418 = vmul.f32 %v2230, %v2402
    %v2419 = vmul.f32 %v2232, %v2403
    %v2420 = vmul.f32 %v2234, %v2404
    %v2421 = vmul.f32 %v2236, %v2405
    %v2422 = vmul.f32 %v2238, %v2406
    %v2423 = vmul.f32 %v2240, %v2407
    %v2424 = vmul.f32 %v2242, %v2408
    %v2425 = vmul.f32 %v2244, %v2409
    %v2426 = vmul.f32 %v2246, %v2410
    %v2427 = vmul.f32 %v2248, %v2411
    %v2428 = vmul.f32 %v2250, %v2412
    %v2429 = vmul.f32 %v2252, %v2413
    %v2430 = vmul.f32 %v2254, %v2414
    %v2431 = vmul.f32 %v2256, %v2415
    %v2432 = vadd.f32 %v2416, %v2417
    %v2433 = vadd.f32 %v2432, %v2418
    %v2434 = vadd.f32 %v2433, %v2419
    %v2435 = vadd.f32 %v2434, %v2420
    %v2436 = vadd.f32 %v2435, %v2421
    %v2437 = vadd.f32 %v2436, %v2422
    %v2438 = vadd.f32 %v2437, %v2423
    %v2439 = vadd.f32 %v2438, %v2424
    %v2440 = vadd.f32 %v2439, %v2425
    %v2441 = vadd.f32 %v2440, %v2426
    %v2442 = vadd.f32 %v2441, %v2427
    %v2443 = vadd.f32 %v2442, %v2428
    %v2444 = vadd.f32 %v2443, %v2429
    %v2445 = vadd.f32 %v2444, %v2430
    %v2446 = vadd.f32 %v2445, %v2431
    %v2447 = vrot.slane %v2446, 4
    %v2448 = vadd.f32 %v2446, %v2447
    %v2449 = vrot.slane %v2448, 2
    %v2450 = vadd.f32 %v2448, %v2449
    %v2451 = vrot.slane %v2450, 1
    %v2452 = vadd.f32 %v2450, %v2451
    %v2453 = vmul.f32 %v2274, %v2400
    %v2454 = vmul.f32 %v2276, %v2401
    %v2455 = vmul.f32 %v2278, %v2402
    %v2456 = vmul.f32 %v2280, %v2403
    %v2457 = vmul.f32 %v2282, %v2404
    %v2458 = vmul.f32 %v2284, %v2405
    %v2459 = vmul.f32 %v2286, %v2406
    %v2460 = vmul.f32 %v2288, %v2407
    %v2461 = vmul.f32 %v2290, %v2408
    %v2462 = vmul.f32 %v2292, %v2409
    %v2463 = vmul.f32 %v2294, %v2410
    %v2464 = vmul.f32 %v2296, %v2411
    %v2465 = vmul.f32 %v2298, %v2412
    %v2466 = vmul.f32 %v2300, %v2413
    %v2467 = vmul.f32 %v2302, %v2414
    %v2468 = vmul.f32 %v2304, %v2415
    %v2469 = vadd.f32 %v2453, %v2454
    %v2470 = vadd.f32 %v2469, %v2455
    %v2471 = vadd.f32 %v2470, %v2456
    %v2472 = vadd.f32 %v2471, %v2457
    %v2473 = vadd.f32 %v2472, %v2458
    %v2474 = vadd.f32 %v2473, %v2459
    %v2475 = vadd.f32 %v2474, %v2460
    %v2476 = vadd.f32 %v2475, %v2461
    %v2477 = vadd.f32 %v2476, %v2462
    %v2478 = vadd.f32 %v2477, %v2463
    %v2479 = vadd.f32 %v2478, %v2464
    %v2480 = vadd.f32 %v2479, %v2465
    %v2481 = vadd.f32 %v2480, %v2466
    %v2482 = vadd.f32 %v2481, %v2467
    %v2483 = vadd.f32 %v2482, %v2468
    %v2484 = vrot.slane %v2483, 4
    %v2485 = vadd.f32 %v2483, %v2484
    %v2486 = vrot.slane %v2485, 2
    %v2487 = vadd.f32 %v2485, %v2486
    %v2488 = vrot.slane %v2487, 1
    %v2489 = vadd.f32 %v2487, %v2488
    %vm2490 = vcmask 1040384
    %v2491 = vsel %vm2490, %v2452, %v2489
    %v2492 = vld [vmem:[%s5] ss:$4 sm:$0xf]
    %s2493 = scalar_lea.vmem %s5, 1
    %v2494 = vld [vmem:[%s2493] ss:$4 sm:$0xf]
    %v2495 = vld [vmem:[%s5 + $0x2] sm:$0x1]
    %v2496 = vpack.c.bf16 %v2491, %v2491
    %v2497 = vld [vmem:[%s3] sm:$0xff]
    %v2498 = vld [vmem:[%s3 + $0x8] sm:$0xff]
    %v2499 = vld [vmem:[%s3 + $0x10] sm:$0xff]
    %v2500 = vld [vmem:[%s3 + $0x18] sm:$0xff]
    %v2501 = vld [vmem:[%s3 + $0x20] sm:$0xff]
    %v2502 = vld [vmem:[%s3 + $0x28] sm:$0xff]
    %v2503 = vld [vmem:[%s3 + $0x30] sm:$0xff]
    %v2504 = vld [vmem:[%s3 + $0x38] sm:$0xff]
    %v2505 = vld [vmem:[%s3 + $0x40] sm:$0xff]
    %v2506 = vld [vmem:[%s3 + $0x48] sm:$0xff]
    %v2507 = vld [vmem:[%s3 + $0x50] sm:$0xff]
    %v2508 = vld [vmem:[%s3 + $0x58] sm:$0xff]
    %v2509 = vld [vmem:[%s3 + $0x60] sm:$0xff]
    %v2510 = vld [vmem:[%s3 + $0x68] sm:$0xff]
    %v2511 = vld [vmem:[%s3 + $0x70] sm:$0xff]
    %v2512 = vld [vmem:[%s3 + $0x78] sm:$0xff]
    %v2513 = vld [vmem:[%s3 + $0x80] sm:$0xff]
    %v2514 = vld [vmem:[%s3 + $0x88] sm:$0xff]
    %v2515 = vld [vmem:[%s3 + $0x90] sm:$0xff]
    %v2516 = vld [vmem:[%s3 + $0x98] sm:$0xff]
    %v2517 = vld [vmem:[%s3 + $0xa0] sm:$0xff]
    %v2518 = vld [vmem:[%s3 + $0xa8] sm:$0xff]
    %v2519 = vld [vmem:[%s3 + $0xb0] sm:$0xff]
    %v2520 = vld [vmem:[%s3 + $0xb8] sm:$0xff]
    %v2521 = vld [vmem:[%s3 + $0xc0] sm:$0xff]
    %v2522 = vld [vmem:[%s3 + $0xc8] sm:$0xff]
    %v2523 = vld [vmem:[%s3 + $0xd0] sm:$0xff]
    %v2524 = vld [vmem:[%s3 + $0xd8] sm:$0xff]
    %v2525 = vld [vmem:[%s3 + $0xe0] sm:$0xff]
    %v2526 = vld [vmem:[%s3 + $0xe8] sm:$0xff]
    %v2527 = vld [vmem:[%s3 + $0xf0] sm:$0xff]
    %v2528 = vld [vmem:[%s3 + $0xf8] sm:$0xff]
    %v2530 = vlaneseq
    %v2531 = vshrl.u32 %v2530, 7
    %v2532 = vsub.s32 0, %v2531
    %v2533 = vrot.slane %v2492, %v2532
    %v2534 = vlaneseq
    %v2535 = vshrl.u32 %v2534, 7
    %v2536 = vsub.s32 1, %v2535
    %v2537 = vrot.slane %v2492, %v2536
    %v2538 = vlaneseq
    %v2539 = vshrl.u32 %v2538, 7
    %v2540 = vsub.s32 2, %v2539
    %v2541 = vrot.slane %v2492, %v2540
    %v2542 = vlaneseq
    %v2543 = vshrl.u32 %v2542, 7
    %v2544 = vsub.s32 3, %v2543
    %v2545 = vrot.slane %v2492, %v2544
    %v2582 = vunpack.c.l.b16 %v2497
    %v2583 = vunpack.c.h.b16 %v2497
    %v2584 = vunpack.c.l.b16 %v2498
    %v2585 = vunpack.c.h.b16 %v2498
    %v2586 = vunpack.c.l.b16 %v2499
    %v2587 = vunpack.c.h.b16 %v2499
    %v2588 = vunpack.c.l.b16 %v2500
    %v2589 = vunpack.c.h.b16 %v2500
    %v2590 = vunpack.c.l.b16 %v2501
    %v2591 = vunpack.c.h.b16 %v2501
    %v2592 = vunpack.c.l.b16 %v2502
    %v2593 = vunpack.c.h.b16 %v2502
    %v2594 = vunpack.c.l.b16 %v2503
    %v2595 = vunpack.c.h.b16 %v2503
    %v2596 = vunpack.c.l.b16 %v2504
    %v2597 = vunpack.c.h.b16 %v2504
    %v2598 = vunpack.c.l.b16 %v2505
    %v2599 = vunpack.c.h.b16 %v2505
    %v2600 = vunpack.c.l.b16 %v2506
    %v2601 = vunpack.c.h.b16 %v2506
    %v2602 = vunpack.c.l.b16 %v2507
    %v2603 = vunpack.c.h.b16 %v2507
    %v2604 = vunpack.c.l.b16 %v2508
    %v2605 = vunpack.c.h.b16 %v2508
    %v2606 = vunpack.c.l.b16 %v2509
    %v2607 = vunpack.c.h.b16 %v2509
    %v2608 = vunpack.c.l.b16 %v2510
    %v2609 = vunpack.c.h.b16 %v2510
    %v2610 = vunpack.c.l.b16 %v2511
    %v2611 = vunpack.c.h.b16 %v2511
    %v2612 = vunpack.c.l.b16 %v2512
    %v2613 = vunpack.c.h.b16 %v2512
    %v2614 = vunpack.c.l.b16 %v2513
    %v2615 = vunpack.c.h.b16 %v2513
    %v2616 = vunpack.c.l.b16 %v2514
    %v2617 = vunpack.c.h.b16 %v2514
    %v2618 = vunpack.c.l.b16 %v2515
    %v2619 = vunpack.c.h.b16 %v2515
    %v2620 = vunpack.c.l.b16 %v2516
    %v2621 = vunpack.c.h.b16 %v2516
    %v2622 = vunpack.c.l.b16 %v2517
    %v2623 = vunpack.c.h.b16 %v2517
    %v2624 = vunpack.c.l.b16 %v2518
    %v2625 = vunpack.c.h.b16 %v2518
    %v2626 = vunpack.c.l.b16 %v2519
    %v2627 = vunpack.c.h.b16 %v2519
    %v2628 = vunpack.c.l.b16 %v2520
    %v2629 = vunpack.c.h.b16 %v2520
    %v2630 = vunpack.c.l.b16 %v2521
    %v2631 = vunpack.c.h.b16 %v2521
    %v2632 = vunpack.c.l.b16 %v2522
    %v2633 = vunpack.c.h.b16 %v2522
    %v2634 = vunpack.c.l.b16 %v2523
    %v2635 = vunpack.c.h.b16 %v2523
    %v2636 = vunpack.c.l.b16 %v2524
    %v2637 = vunpack.c.h.b16 %v2524
    %v2638 = vunpack.c.l.b16 %v2525
    %v2639 = vunpack.c.h.b16 %v2525
    %v2640 = vunpack.c.l.b16 %v2526
    %v2641 = vunpack.c.h.b16 %v2526
    %v2642 = vunpack.c.l.b16 %v2527
    %v2643 = vunpack.c.h.b16 %v2527
    %v2644 = vunpack.c.l.b16 %v2528
    %v2645 = vunpack.c.h.b16 %v2528
    %v2646 = vpack.c.b16 %v2586, %v2582
    %v2647 = vpack.c.b16 %v2587, %v2583
    %v2648 = vpack.c.b16 %v2588, %v2584
    %v2649 = vpack.c.b16 %v2589, %v2585
    %v2650 = vpack.c.b16 %v2594, %v2590
    %v2651 = vpack.c.b16 %v2595, %v2591
    %v2652 = vpack.c.b16 %v2596, %v2592
    %v2653 = vpack.c.b16 %v2597, %v2593
    %v2654 = vpack.c.b16 %v2602, %v2598
    %v2655 = vpack.c.b16 %v2603, %v2599
    %v2656 = vpack.c.b16 %v2604, %v2600
    %v2657 = vpack.c.b16 %v2605, %v2601
    %v2658 = vpack.c.b16 %v2610, %v2606
    %v2659 = vpack.c.b16 %v2611, %v2607
    %v2660 = vpack.c.b16 %v2612, %v2608
    %v2661 = vpack.c.b16 %v2613, %v2609
    %v2662 = vpack.c.b16 %v2618, %v2614
    %v2663 = vpack.c.b16 %v2619, %v2615
    %v2664 = vpack.c.b16 %v2620, %v2616
    %v2665 = vpack.c.b16 %v2621, %v2617
    %v2666 = vpack.c.b16 %v2626, %v2622
    %v2667 = vpack.c.b16 %v2627, %v2623
    %v2668 = vpack.c.b16 %v2628, %v2624
    %v2669 = vpack.c.b16 %v2629, %v2625
    %v2670 = vpack.c.b16 %v2634, %v2630
    %v2671 = vpack.c.b16 %v2635, %v2631
    %v2672 = vpack.c.b16 %v2636, %v2632
    %v2673 = vpack.c.b16 %v2637, %v2633
    %v2674 = vpack.c.b16 %v2642, %v2638
    %v2675 = vpack.c.b16 %v2643, %v2639
    %v2676 = vpack.c.b16 %v2644, %v2640
    %v2677 = vpack.c.b16 %v2645, %v2641
    %2710 = vmatprep.subr.bf16.mxu0 %v2647
    %2711 = vmatpush1.bf16.msra.mxu0 %v2646
    %2712 = vmatprep.subr.bf16.mxu0 %v2651
    %2713 = vmatpush1.bf16.msra.mxu0 %v2650
    %2714 = vmatprep.subr.bf16.mxu0 %v2655
    %2715 = vmatpush1.bf16.msra.mxu0 %v2654
    %2716 = vmatprep.subr.bf16.mxu0 %v2659
    %2717 = vmatpush1.bf16.msra.mxu0 %v2658
    %2718 = vmatprep.subr.bf16.mxu0 %v2663
    %2719 = vmatpush1.bf16.msra.mxu0 %v2662
    %2720 = vmatprep.subr.bf16.mxu0 %v2667
    %2721 = vmatpush1.bf16.msra.mxu0 %v2666
    %2722 = vmatprep.subr.bf16.mxu0 %v2671
    %2723 = vmatpush1.bf16.msra.mxu0 %v2670
    %2724 = vmatprep.subr.bf16.mxu0 %v2675
    %2725 = vmatpush1.bf16.msra.mxu0 %v2674
    %2726 = vmatprep.subr.bf16.mxu0 0
    %2727 = vmatpush1.bf16.msra.mxu0 0
    %2728 = vmatprep.subr.bf16.mxu0 0
    %2729 = vmatpush1.bf16.msra.mxu0 0
    %2730 = vmatprep.subr.bf16.mxu0 0
    %2731 = vmatpush1.bf16.msra.mxu0 0
    %2732 = vmatprep.subr.bf16.mxu0 0
    %2733 = vmatpush1.bf16.msra.mxu0 0
    %2734 = vmatprep.subr.bf16.mxu0 0
    %2735 = vmatpush1.bf16.msra.mxu0 0
    %2736 = vmatprep.subr.bf16.mxu0 0
    %2737 = vmatpush1.bf16.msra.mxu0 0
    %2738 = vmatprep.subr.bf16.mxu0 0
    %2739 = vmatpush1.bf16.msra.mxu0 0
    %2740 = vmatprep.subr.bf16.mxu0 0
    %2741 = vmatpush1.bf16.msra.mxu0 0
    %2742 = vmatprep.mubr.bf16.mxu0 0
    %2743 = vmatmul.mubr.bf16.gmra.mrb[0].mxu0 %v2496
    %v2744 = vpop.f32.mrb[0].mxu0
    %v2745 = vadd.f32 %v2533, %v2744
    %v2746 = vpop.f32.mrb[0].mxu0
    %v2747 = vadd.f32 %v2537, %v2746
    %v2748 = vpop.f32.mrb[0].mxu0
    %v2749 = vpop.f32.mrb[0].mxu0
    %2750 = vdwg.mxu0
    %2751 = vmatprep.subr.bf16.mxu0 %v2649
    %2752 = vmatpush1.bf16.msra.mxu0 %v2648
    %2753 = vmatprep.subr.bf16.mxu0 %v2653
    %2754 = vmatpush1.bf16.msra.mxu0 %v2652
    %2755 = vmatprep.subr.bf16.mxu0 %v2657
    %2756 = vmatpush1.bf16.msra.mxu0 %v2656
    %2757 = vmatprep.subr.bf16.mxu0 %v2661
    %2758 = vmatpush1.bf16.msra.mxu0 %v2660
    %2759 = vmatprep.subr.bf16.mxu0 %v2665
    %2760 = vmatpush1.bf16.msra.mxu0 %v2664
    %2761 = vmatprep.subr.bf16.mxu0 %v2669
    %2762 = vmatpush1.bf16.msra.mxu0 %v2668
    %2763 = vmatprep.subr.bf16.mxu0 %v2673
    %2764 = vmatpush1.bf16.msra.mxu0 %v2672
    %2765 = vmatprep.subr.bf16.mxu0 %v2677
    %2766 = vmatpush1.bf16.msra.mxu0 %v2676
    %2767 = vmatprep.subr.bf16.mxu0 0
    %2768 = vmatpush1.bf16.msra.mxu0 0
    %2769 = vmatprep.subr.bf16.mxu0 0
    %2770 = vmatpush1.bf16.msra.mxu0 0
    %2771 = vmatprep.subr.bf16.mxu0 0
    %2772 = vmatpush1.bf16.msra.mxu0 0
    %2773 = vmatprep.subr.bf16.mxu0 0
    %2774 = vmatpush1.bf16.msra.mxu0 0
    %2775 = vmatprep.subr.bf16.mxu0 0
    %2776 = vmatpush1.bf16.msra.mxu0 0
    %2777 = vmatprep.subr.bf16.mxu0 0
    %2778 = vmatpush1.bf16.msra.mxu0 0
    %2779 = vmatprep.subr.bf16.mxu0 0
    %2780 = vmatpush1.bf16.msra.mxu0 0
    %2781 = vmatprep.subr.bf16.mxu0 0
    %2782 = vmatpush1.bf16.msra.mxu0 0
    %2783 = vmatprep.mubr.bf16.mxu0 0
    %2784 = vmatmul.mubr.bf16.gmra.mrb[0].mxu0 %v2496
    %v2785 = vpop.f32.mrb[0].mxu0
    %v2786 = vadd.f32 %v2541, %v2785
    %v2787 = vpop.f32.mrb[0].mxu0
    %v2788 = vadd.f32 %v2545, %v2787
    %v2789 = vpop.f32.mrb[0].mxu0
    %v2790 = vpop.f32.mrb[0].mxu0
    %2791 = vdwg.mxu0
    %v2792 = vmax.f32 %v2745, 0.0
    %v2793 = vmax.f32 %v2747, 0.0
    %v2794 = vmax.f32 %v2786, 0.0
    %v2795 = vmax.f32 %v2788, 0.0
    %v2796 = vmin.f32 %v2745, 0.0
    %v2797 = vmin.f32 %v2747, 0.0
    %v2798 = vmin.f32 %v2786, 0.0
    %v2799 = vmin.f32 %v2788, 0.0
    %v2801 = vlaneseq
    %v2802 = vshrl.u32 %v2801, 7
    %v2803 = vsub.s32 0, %v2802
    %v2804 = vrot.slane %v2494, %v2803
    %v2805 = vlaneseq
    %v2806 = vshrl.u32 %v2805, 7
    %v2807 = vsub.s32 1, %v2806
    %v2808 = vrot.slane %v2494, %v2807
    %v2809 = vlaneseq
    %v2810 = vshrl.u32 %v2809, 7
    %v2811 = vsub.s32 2, %v2810
    %v2812 = vrot.slane %v2494, %v2811
    %v2813 = vlaneseq
    %v2814 = vshrl.u32 %v2813, 7
    %v2815 = vsub.s32 3, %v2814
    %v2816 = vrot.slane %v2494, %v2815
    %v2821 = vmul.f32 %v2804, %v2796
    %v2822 = vmul.f32 %v2808, %v2797
    %v2823 = vmul.f32 %v2812, %v2798
    %v2824 = vmul.f32 %v2816, %v2799
    %v2825 = vadd.f32 %v2792, %v2821
    %v2826 = vadd.f32 %v2793, %v2822
    %v2827 = vadd.f32 %v2794, %v2823
    %v2828 = vadd.f32 %v2795, %v2824
    %v2829 = vpack.c.bf16 %v2825, %v2825
    %v2830 = vpack.c.bf16 %v2826, %v2826
    %v2831 = vpack.c.bf16 %v2827, %v2827
    %v2832 = vpack.c.bf16 %v2828, %v2828
    %v2833 = vld [vmem:[%s4] sm:$0xf]
    %v2834 = vld [vmem:[%s4 + $0x4] sm:$0xf]
    %v2835 = vld [vmem:[%s4 + $0x8] sm:$0xf]
    %v2836 = vld [vmem:[%s4 + $0xc] sm:$0xf]
    %v2837 = vld [vmem:[%s4 + $0x10] sm:$0xf]
    %v2838 = vld [vmem:[%s4 + $0x14] sm:$0xf]
    %v2839 = vld [vmem:[%s4 + $0x18] sm:$0xf]
    %v2840 = vld [vmem:[%s4 + $0x1c] sm:$0xf]
    %v2841 = vld [vmem:[%s4 + $0x20] sm:$0xf]
    %v2842 = vld [vmem:[%s4 + $0x24] sm:$0xf]
    %v2843 = vld [vmem:[%s4 + $0x28] sm:$0xf]
    %v2844 = vld [vmem:[%s4 + $0x2c] sm:$0xf]
    %v2845 = vld [vmem:[%s4 + $0x30] sm:$0xf]
    %v2846 = vld [vmem:[%s4 + $0x34] sm:$0xf]
    %v2847 = vld [vmem:[%s4 + $0x38] sm:$0xf]
    %v2848 = vld [vmem:[%s4 + $0x3c] sm:$0xf]
    %v2849 = vld [vmem:[%s4 + $0x40] sm:$0xf]
    %v2850 = vld [vmem:[%s4 + $0x44] sm:$0xf]
    %v2851 = vld [vmem:[%s4 + $0x48] sm:$0xf]
    %v2852 = vld [vmem:[%s4 + $0x4c] sm:$0xf]
    %v2853 = vld [vmem:[%s4 + $0x50] sm:$0xf]
    %v2854 = vld [vmem:[%s4 + $0x54] sm:$0xf]
    %v2855 = vld [vmem:[%s4 + $0x58] sm:$0xf]
    %v2856 = vld [vmem:[%s4 + $0x5c] sm:$0xf]
    %v2857 = vld [vmem:[%s4 + $0x60] sm:$0xf]
    %v2858 = vld [vmem:[%s4 + $0x64] sm:$0xf]
    %v2859 = vld [vmem:[%s4 + $0x68] sm:$0xf]
    %v2860 = vld [vmem:[%s4 + $0x6c] sm:$0xf]
    %v2861 = vld [vmem:[%s4 + $0x70] sm:$0xf]
    %v2862 = vld [vmem:[%s4 + $0x74] sm:$0xf]
    %v2863 = vld [vmem:[%s4 + $0x78] sm:$0xf]
    %v2864 = vld [vmem:[%s4 + $0x7c] sm:$0xf]
    %v2865 = vld [vmem:[%s4 + $0x80] sm:$0xf]
    %v2866 = vld [vmem:[%s4 + $0x84] sm:$0xf]
    %v2867 = vld [vmem:[%s4 + $0x88] sm:$0xf]
    %v2868 = vld [vmem:[%s4 + $0x8c] sm:$0xf]
    %v2869 = vld [vmem:[%s4 + $0x90] sm:$0xf]
    %v2870 = vld [vmem:[%s4 + $0x94] sm:$0xf]
    %v2871 = vld [vmem:[%s4 + $0x98] sm:$0xf]
    %v2872 = vld [vmem:[%s4 + $0x9c] sm:$0xf]
    %v2873 = vld [vmem:[%s4 + $0xa0] sm:$0xf]
    %v2874 = vld [vmem:[%s4 + $0xa4] sm:$0xf]
    %v2875 = vld [vmem:[%s4 + $0xa8] sm:$0xf]
    %v2876 = vld [vmem:[%s4 + $0xac] sm:$0xf]
    %v2877 = vld [vmem:[%s4 + $0xb0] sm:$0xf]
    %v2878 = vld [vmem:[%s4 + $0xb4] sm:$0xf]
    %v2879 = vld [vmem:[%s4 + $0xb8] sm:$0xf]
    %v2880 = vld [vmem:[%s4 + $0xbc] sm:$0xf]
    %v2881 = vld [vmem:[%s4 + $0xc0] sm:$0xf]
    %v2882 = vld [vmem:[%s4 + $0xc4] sm:$0xf]
    %v2883 = vld [vmem:[%s4 + $0xc8] sm:$0xf]
    %v2884 = vld [vmem:[%s4 + $0xcc] sm:$0xf]
    %v2885 = vld [vmem:[%s4 + $0xd0] sm:$0xf]
    %v2886 = vld [vmem:[%s4 + $0xd4] sm:$0xf]
    %v2887 = vld [vmem:[%s4 + $0xd8] sm:$0xf]
    %v2888 = vld [vmem:[%s4 + $0xdc] sm:$0xf]
    %v2889 = vld [vmem:[%s4 + $0xe0] sm:$0xf]
    %v2890 = vld [vmem:[%s4 + $0xe4] sm:$0xf]
    %v2891 = vld [vmem:[%s4 + $0xe8] sm:$0xf]
    %v2892 = vld [vmem:[%s4 + $0xec] sm:$0xf]
    %v2893 = vld [vmem:[%s4 + $0xf0] sm:$0xf]
    %v2894 = vld [vmem:[%s4 + $0xf4] sm:$0xf]
    %v2895 = vld [vmem:[%s4 + $0xf8] sm:$0xf]
    %v2896 = vld [vmem:[%s4 + $0xfc] sm:$0xf]
    %v2897 = vlaneseq
    %v2898 = vshrl.u32 %v2897, 7
    %v2899 = vsub.s32 0, %v2898
    %v2900 = vrot.slane %v2495, %v2899
    %v2965 = vunpack.c.l.b16 %v2833
    %v2966 = vunpack.c.l.b16 %v2834
    %v2967 = vunpack.c.l.b16 %v2835
    %v2968 = vunpack.c.l.b16 %v2836
    %v2969 = vunpack.c.l.b16 %v2837
    %v2970 = vunpack.c.l.b16 %v2838
    %v2971 = vunpack.c.l.b16 %v2839
    %v2972 = vunpack.c.l.b16 %v2840
    %v2973 = vunpack.c.l.b16 %v2841
    %v2974 = vunpack.c.l.b16 %v2842
    %v2975 = vunpack.c.l.b16 %v2843
    %v2976 = vunpack.c.l.b16 %v2844
    %v2977 = vunpack.c.l.b16 %v2845
    %v2978 = vunpack.c.l.b16 %v2846
    %v2979 = vunpack.c.l.b16 %v2847
    %v2980 = vunpack.c.l.b16 %v2848
    %v2981 = vunpack.c.l.b16 %v2849
    %v2982 = vunpack.c.l.b16 %v2850
    %v2983 = vunpack.c.l.b16 %v2851
    %v2984 = vunpack.c.l.b16 %v2852
    %v2985 = vunpack.c.l.b16 %v2853
    %v2986 = vunpack.c.l.b16 %v2854
    %v2987 = vunpack.c.l.b16 %v2855
    %v2988 = vunpack.c.l.b16 %v2856
    %v2989 = vunpack.c.l.b16 %v2857
    %v2990 = vunpack.c.l.b16 %v2858
    %v2991 = vunpack.c.l.b16 %v2859
    %v2992 = vunpack.c.l.b16 %v2860
    %v2993 = vunpack.c.l.b16 %v2861
    %v2994 = vunpack.c.l.b16 %v2862
    %v2995 = vunpack.c.l.b16 %v2863
    %v2996 = vunpack.c.l.b16 %v2864
    %v2997 = vunpack.c.l.b16 %v2865
    %v2998 = vunpack.c.l.b16 %v2866
    %v2999 = vunpack.c.l.b16 %v2867
    %v3000 = vunpack.c.l.b16 %v2868
    %v3001 = vunpack.c.l.b16 %v2869
    %v3002 = vunpack.c.l.b16 %v2870
    %v3003 = vunpack.c.l.b16 %v2871
    %v3004 = vunpack.c.l.b16 %v2872
    %v3005 = vunpack.c.l.b16 %v2873
    %v3006 = vunpack.c.l.b16 %v2874
    %v3007 = vunpack.c.l.b16 %v2875
    %v3008 = vunpack.c.l.b16 %v2876
    %v3009 = vunpack.c.l.b16 %v2877
    %v3010 = vunpack.c.l.b16 %v2878
    %v3011 = vunpack.c.l.b16 %v2879
    %v3012 = vunpack.c.l.b16 %v2880
    %v3013 = vunpack.c.l.b16 %v2881
    %v3014 = vunpack.c.l.b16 %v2882
    %v3015 = vunpack.c.l.b16 %v2883
    %v3016 = vunpack.c.l.b16 %v2884
    %v3017 = vunpack.c.l.b16 %v2885
    %v3018 = vunpack.c.l.b16 %v2886
    %v3019 = vunpack.c.l.b16 %v2887
    %v3020 = vunpack.c.l.b16 %v2888
    %v3021 = vunpack.c.l.b16 %v2889
    %v3022 = vunpack.c.l.b16 %v2890
    %v3023 = vunpack.c.l.b16 %v2891
    %v3024 = vunpack.c.l.b16 %v2892
    %v3025 = vunpack.c.l.b16 %v2893
    %v3026 = vunpack.c.l.b16 %v2894
    %v3027 = vunpack.c.l.b16 %v2895
    %v3028 = vunpack.c.l.b16 %v2896
    %v3029 = vpack.c.b16 %v2966, %v2965
    %v3030 = vpack.c.b16 %v2968, %v2967
    %v3031 = vpack.c.b16 %v2970, %v2969
    %v3032 = vpack.c.b16 %v2972, %v2971
    %v3033 = vpack.c.b16 %v2974, %v2973
    %v3034 = vpack.c.b16 %v2976, %v2975
    %v3035 = vpack.c.b16 %v2978, %v2977
    %v3036 = vpack.c.b16 %v2980, %v2979
    %v3037 = vpack.c.b16 %v2982, %v2981
    %v3038 = vpack.c.b16 %v2984, %v2983
    %v3039 = vpack.c.b16 %v2986, %v2985
    %v3040 = vpack.c.b16 %v2988, %v2987
    %v3041 = vpack.c.b16 %v2990, %v2989
    %v3042 = vpack.c.b16 %v2992, %v2991
    %v3043 = vpack.c.b16 %v2994, %v2993
    %v3044 = vpack.c.b16 %v2996, %v2995
    %v3045 = vpack.c.b16 %v2998, %v2997
    %v3046 = vpack.c.b16 %v3000, %v2999
    %v3047 = vpack.c.b16 %v3002, %v3001
    %v3048 = vpack.c.b16 %v3004, %v3003
    %v3049 = vpack.c.b16 %v3006, %v3005
    %v3050 = vpack.c.b16 %v3008, %v3007
    %v3051 = vpack.c.b16 %v3010, %v3009
    %v3052 = vpack.c.b16 %v3012, %v3011
    %v3053 = vpack.c.b16 %v3014, %v3013
    %v3054 = vpack.c.b16 %v3016, %v3015
    %v3055 = vpack.c.b16 %v3018, %v3017
    %v3056 = vpack.c.b16 %v3020, %v3019
    %v3057 = vpack.c.b16 %v3022, %v3021
    %v3058 = vpack.c.b16 %v3024, %v3023
    %v3059 = vpack.c.b16 %v3026, %v3025
    %v3060 = vpack.c.b16 %v3028, %v3027
    %3093 = vmatprep.subr.bf16.mxu0 0
    %3094 = vmatpush1.bf16.msra.mxu0 %v3029
    %3095 = vmatprep.subr.bf16.mxu0 0
    %3096 = vmatpush1.bf16.msra.mxu0 %v3030
    %3097 = vmatprep.subr.bf16.mxu0 0
    %3098 = vmatpush1.bf16.msra.mxu0 %v3031
    %3099 = vmatprep.subr.bf16.mxu0 0
    %3100 = vmatpush1.bf16.msra.mxu0 %v3032
    %3101 = vmatprep.subr.bf16.mxu0 0
    %3102 = vmatpush1.bf16.msra.mxu0 %v3033
    %3103 = vmatprep.subr.bf16.mxu0 0
    %3104 = vmatpush1.bf16.msra.mxu0 %v3034
    %3105 = vmatprep.subr.bf16.mxu0 0
    %3106 = vmatpush1.bf16.msra.mxu0 %v3035
    %3107 = vmatprep.subr.bf16.mxu0 0
    %3108 = vmatpush1.bf16.msra.mxu0 %v3036
    %3109 = vmatprep.subr.bf16.mxu0 0
    %3110 = vmatpush1.bf16.msra.mxu0 %v3037
    %3111 = vmatprep.subr.bf16.mxu0 0
    %3112 = vmatpush1.bf16.msra.mxu0 %v3038
    %3113 = vmatprep.subr.bf16.mxu0 0
    %3114 = vmatpush1.bf16.msra.mxu0 %v3039
    %3115 = vmatprep.subr.bf16.mxu0 0
    %3116 = vmatpush1.bf16.msra.mxu0 %v3040
    %3117 = vmatprep.subr.bf16.mxu0 0
    %3118 = vmatpush1.bf16.msra.mxu0 %v3041
    %3119 = vmatprep.subr.bf16.mxu0 0
    %3120 = vmatpush1.bf16.msra.mxu0 %v3042
    %3121 = vmatprep.subr.bf16.mxu0 0
    %3122 = vmatpush1.bf16.msra.mxu0 %v3043
    %3123 = vmatprep.subr.bf16.mxu0 0
    %3124 = vmatpush1.bf16.msra.mxu0 %v3044
    %3125 = vmatprep.mubr.bf16.mxu0 %v2830
    %3126 = vmatmul.mubr.bf16.gmra.mrb[0].mxu0 %v2829
    %v3127 = vpop.f32.mrb[0].mxu0
    %v3128 = vadd.f32 %v2900, %v3127
    %v3129 = vpop.f32.mrb[0].mxu0
    %v3130 = vpop.f32.mrb[0].mxu0
    %v3131 = vpop.f32.mrb[0].mxu0
    %3132 = vdwg.mxu0
    %3133 = vmatprep.subr.bf16.mxu0 0
    %3134 = vmatpush1.bf16.msra.mxu0 %v3045
    %3135 = vmatprep.subr.bf16.mxu0 0
    %3136 = vmatpush1.bf16.msra.mxu0 %v3046
    %3137 = vmatprep.subr.bf16.mxu0 0
    %3138 = vmatpush1.bf16.msra.mxu0 %v3047
    %3139 = vmatprep.subr.bf16.mxu0 0
    %3140 = vmatpush1.bf16.msra.mxu0 %v3048
    %3141 = vmatprep.subr.bf16.mxu0 0
    %3142 = vmatpush1.bf16.msra.mxu0 %v3049
    %3143 = vmatprep.subr.bf16.mxu0 0
    %3144 = vmatpush1.bf16.msra.mxu0 %v3050
    %3145 = vmatprep.subr.bf16.mxu0 0
    %3146 = vmatpush1.bf16.msra.mxu0 %v3051
    %3147 = vmatprep.subr.bf16.mxu0 0
    %3148 = vmatpush1.bf16.msra.mxu0 %v3052
    %3149 = vmatprep.subr.bf16.mxu0 0
    %3150 = vmatpush1.bf16.msra.mxu0 %v3053
    %3151 = vmatprep.subr.bf16.mxu0 0
    %3152 = vmatpush1.bf16.msra.mxu0 %v3054
    %3153 = vmatprep.subr.bf16.mxu0 0
    %3154 = vmatpush1.bf16.msra.mxu0 %v3055
    %3155 = vmatprep.subr.bf16.mxu0 0
    %3156 = vmatpush1.bf16.msra.mxu0 %v3056
    %3157 = vmatprep.subr.bf16.mxu0 0
    %3158 = vmatpush1.bf16.msra.mxu0 %v3057
    %3159 = vmatprep.subr.bf16.mxu0 0
    %3160 = vmatpush1.bf16.msra.mxu0 %v3058
    %3161 = vmatprep.subr.bf16.mxu0 0
    %3162 = vmatpush1.bf16.msra.mxu0 %v3059
    %3163 = vmatprep.subr.bf16.mxu0 0
    %3164 = vmatpush1.bf16.msra.mxu0 %v3060
    %3165 = vmatprep.mubr.bf16.mxu0 %v2832
    %3166 = vmatmul.mubr.bf16.gmra.mrb[0].mxu0 %v2831
    %v3167 = vpop.f32.mrb[0].mxu0
    %v3168 = vadd.f32 %v3128, %v3167
    %v3169 = vpop.f32.mrb[0].mxu0
    %v3170 = vpop.f32.mrb[0].mxu0
    %v3171 = vpop.f32.mrb[0].mxu0
    %3172 = vdwg.mxu0
    %3173 = vst [vmem:[#allocation2] sm:$0x3] %v3168
    // Predicated region
    $region26: #{graph_cnn_kipf_forward.1} parent=1 // pred_check
      _
    $region27: #{graph_cnn_kipf_forward.1} parent=1 // pred_check_branch
      %3175 = sbr.rel (0) target = $region29
    $region28: #{graph_cnn_kipf_forward.1} parent=1 // pred_region
      %s3177 = ssub.s32 32, 32
      %3178 = vsyncadd [#allocation3], %s3177
      %s3180 = sshll.u32 [#allocation2], 4
      %s3181 = int_to_ptr.vmem [resolvable:$true] %s3180
      %3183 = dma.vmem_to_hbm [thread:$0]  %s3181, 32, %s6, [#allocation3]
    $region29: #{graph_cnn_kipf_forward.1} parent=1 // pred_fallthru
      _
    // Predicated region
    $region30: #{graph_cnn_kipf_forward.1} parent=1 // pred_check
      _
    $region31: #{graph_cnn_kipf_forward.1} parent=1 // pred_check_branch
      %3185 = sbr.rel (0) target = $region33
    $region32: #{graph_cnn_kipf_forward.1} parent=1 // pred_region
      %3186 = dma.done [#allocation3], 32
    $region33: #{graph_cnn_kipf_forward.1} parent=1 // pred_fallthru
      _
    %3187 = vsyncpa [#allocation3], 1

</llo_original>
